<compile_context>
chip_gen: v7x
topology: tpu7x:2x2x1
jax: 0.10.0
libtpu: 0.0.40
codegen_flags: <defaults>
</compile_context>

<pallas_src>
from functools import partial

import jax
import jax.numpy as jnp
from jax.experimental import pallas as pl
from jax.experimental.pallas import tpu as pltpu

PAD = 2  # universal halo: the largest conv in the net is 5x5 (pad 2)


# ---------------------------------------------------------------------------
# Universal padded layout helpers
# ---------------------------------------------------------------------------
def _hwkey(H, W):
    Wp = W + 2 * PAD
    Hp = H + 2 * PAD
    Lc = H * Wp                    # contiguous "slab" covering all valid output rows
    Lpad = Hp * Wp + 2 * PAD       # flattened padded plane + 2P trailing zeros
    base = PAD * Wp + PAD          # slab start = flattened index of pixel (0, 0)
    return (H, W, PAD, Wp, Lc, Lpad, base)


def _make_mask(hw):
    """(1, Lc) f32 mask: 1 at valid output pixels of the slab, 0 at wrap/spill columns."""
    H, W, P, Wp, Lc, Lpad, base = hw
    col = base + jnp.arange(Lc, dtype=jnp.int32)
    r = col // Wp
    c = col % Wp
    valid = (r >= P) & (r < P + H) & (c >= P) & (c < P + W)
    return valid.astype(jnp.float32).reshape(1, Lc)


def from_img(x):
    """(B, C, H, W) -> universal padded layout (B, C, Lpad) with exact zero halo."""
    B, C, H, W = x.shape
    P = PAD
    Hp, Wp = H + 2 * P, W + 2 * P
    xp = jnp.pad(x, ((0, 0), (0, 0), (P, P), (P, P)))
    xf = xp.reshape(B, C, Hp * Wp)
    return jnp.pad(xf, ((0, 0), (0, 0), (0, 2 * P)))


def to_img(xf, H, W):
    """Universal padded layout (B, C, Lpad) -> (B, C, H, W)."""
    B, C, _ = xf.shape
    P = PAD
    Hp, Wp = H + 2 * P, W + 2 * P
    xi = xf[:, :, :Hp * Wp].reshape(B, C, Hp, Wp)
    return xi[:, :, P:P + H, P:P + W]


# ---------------------------------------------------------------------------
# In-kernel helpers
# ---------------------------------------------------------------------------
def _apply_act(y, act):
    if act == "relu":
        return jnp.maximum(y, 0.0)
    if act == "lrelu":
        return jnp.where(y >= 0, y, 0.2 * y)
    if act == "sigmoid":
        z = jnp.clip(y, -30.0, 30.0)          # numerically safe sigmoid
        return 1.0 / (1.0 + jnp.exp(-z))
    return y


def _conv_layer(src_ref, w_ref, b_ref, k, pad, cin, hw):
    """One 'same' conv layer on the universal layout: tap-stacked bf16 MXU matmul."""
    H, W, P, Wp, Lc, Lpad, base = hw
    kk = k * k
    taps = []
    for t in range(kk):
        dy, dx = divmod(t, k)
        off = base + (dy - pad) * Wp + (dx - pad)       # always in-bounds since pad <= P
        taps.append(src_ref[pl.ds(0, cin), pl.ds(off, Lc)])
    if cin * kk == 1:
        acc = w_ref[...].astype(jnp.float32) * taps[0]  # degenerate 1x1x1 conv: VPU path
    else:
        stack = taps[0] if kk == 1 else jnp.concatenate(taps, axis=0)
        acc = jnp.dot(w_ref[...], stack.astype(jnp.bfloat16),
                      preferred_element_type=jnp.float32)
    return acc + b_ref[...]


def _store_universal(o_ref, slab, hw):
    """Store a (Cout, Lc) slab into a universal-layout ref, zeroing the halo regions."""
    H, W, P, Wp, Lc, Lpad, base = hw
    zo = jnp.zeros((o_ref.shape[0], base), jnp.float32)
    o_ref[:, pl.ds(0, base)] = zo
    o_ref[:, pl.ds(base, Lc)] = slab
    o_ref[:, pl.ds(base + Lc, base)] = zo


# ---------------------------------------------------------------------------
# Pallas kernels
# ---------------------------------------------------------------------------
def _chain_kernel(*refs, meta, hw, epilogue):
    """Fused chain of 'same' convs (+act, +residual) entirely in VMEM.

    refs layout: x, mask, (w0, b0, w1, b1, ...), out, [buf0[, buf1]]
      x    : (Cin0, Lpad)   universal padded layout (zero halo)
      mask : (1, Lc)        1 at valid output pixels of the slab
      w_j  : (Cout_j, Cin_j*k_j*k_j)  bf16 tap-stacked weights
      b_j  : (Cout_j, 1)    f32
      out  : (Cout_last, Lpad)   (or (Cin0, Lpad) for the 'scale' epilogue)
      buf* : (Cbuf, Lpad) VMEM scratch ping-pong buffers (universal layout)
    meta : tuple of (k, pad, act, res, cin, cout) per layer (static).
    epilogue 'scale': last layer is a 2-channel sigmoid attention map; output is the
      channel-split input scaled by it: [x[:half]*a0 ; x[half:]*a1]  (KernelGenerator attn).
    """
    H, W, P, Wp, Lc, Lpad, base = hw
    n = len(meta)
    x_ref, mask_ref = refs[0], refs[1]
    wb = refs[2:2 + 2 * n]
    o_ref = refs[2 + 2 * n]
    bufs = refs[3 + 2 * n:]
    mask = mask_ref[...]

    # scratch buffers keep the universal layout: zero their halo regions
    for buf in bufs:
        z = jnp.zeros((buf.shape[0], base), jnp.float32)
        buf[:, pl.ds(0, base)] = z
        buf[:, pl.ds(base + Lc, base)] = z

    cur = x_ref
    for j, (k, pad, act, res, cin, cout) in enumerate(meta):
        acc = _conv_layer(cur, wb[2 * j], wb[2 * j + 1], k, pad, cin, hw)
        acc = _apply_act(acc, act)
        if res:                                       # resblock-style skip, 2 layers back
            src = x_ref if j < 2 else bufs[j % 2]
            acc = acc + src[pl.ds(0, cout), pl.ds(base, Lc)]
        if j == n - 1:
            if epilogue == "scale":
                half = x_ref.shape[0] // 2
                xin = x_ref[:, pl.ds(base, Lc)]       # zero halo -> no extra mask needed
                out_slab = jnp.concatenate(
                    [xin[:half] * acc[0:1, :], xin[half:] * acc[1:2, :]], axis=0)
            else:
                out_slab = acc * mask                 # restore exact zero halo
            _store_universal(o_ref, out_slab, hw)
        else:
            dst = bufs[j % 2]
            dst[pl.ds(0, cout), pl.ds(base, Lc)] = acc * mask
            cur = dst


def _adaptive_kernel(x_ref, spa_ref, spe_ref, mask_ref, ow_ref, ob_ref,
                     o_ref, feat_ref, *, ks, pads, hw):
    """KernelNorms + the three adaptive convolutions + fused out_conv (3C->C, 3x3).

    x_ref   : (C, Lpad)   attention-scaled x, universal layout
    spa_ref : (35, Lpad)  raw concatenated spatial kernels, universal layout
    spe_ref : (C, 35)     raw concatenated spectral kernels
    ow/ob   : out_conv weights (C, 3C*9) bf16 / (C, 1) f32
    o_ref   : (C, Lpad)
    feat_ref: (3C, Lpad)  VMEM scratch holding [f1 ; f3 ; f5] in the universal layout
    """
    H, W, P, Wp, Lc, Lpad, base = hw
    C = x_ref.shape[0]
    mask = mask_ref[...]

    # spatial KernelNorm: per position across the 35 taps (unbiased, matches torch.std()).
    spa = spa_ref[:, pl.ds(base, Lc)]
    nt = spa.shape[0]
    sm = jnp.mean(spa, axis=0, keepdims=True)
    sc = spa - sm
    svar = jnp.sum(sc * sc, axis=0, keepdims=True) * (1.0 / (nt - 1))
    spa_n = sc * jax.lax.rsqrt(svar + 1e-20)          # rsqrt -> EUP slot

    # spectral KernelNorm: per channel across the 35 taps.
    spe = spe_ref[...]
    ne = spe.shape[1]
    em = jnp.mean(spe, axis=1, keepdims=True)
    ec = spe - em
    evar = jnp.sum(ec * ec, axis=1, keepdims=True) * (1.0 / (ne - 1))
    spe_n = ec * jax.lax.rsqrt(evar + 1e-20)

    # zero halo regions of the feature scratch (universal layout invariant)
    z = jnp.zeros((feat_ref.shape[0], base), jnp.float32)
    feat_ref[:, pl.ds(0, base)] = z
    feat_ref[:, pl.ds(base + Lc, base)] = z

    t0 = 0
    for i, (k, pad) in enumerate(zip(ks, pads)):
        acc = jnp.zeros((C, Lc), jnp.float32)
        for t in range(k * k):
            dy, dx = divmod(t, k)
            off = base + (dy - pad) * Wp + (dx - pad)
            acc = acc + (x_ref[:, pl.ds(off, Lc)]
                         * spa_n[t0 + t:t0 + t + 1, :]
                         * spe_n[:, t0 + t:t0 + t + 1])
        feat_ref[pl.ds(i * C, C), pl.ds(base, Lc)] = acc * mask   # direct per-branch store
        t0 += k * k

    # fused out_conv: dense 3x3 over the concatenated (3C) features, bf16 MXU matmul.
    taps = []
    for t in range(9):
        dy, dx = divmod(t, 3)
        off = base + (dy - 1) * Wp + (dx - 1)
        taps.append(feat_ref[:, pl.ds(off, Lc)])
    stack = jnp.concatenate(taps, axis=0).astype(jnp.bfloat16)
    outv = jnp.dot(ow_ref[...], stack, preferred_element_type=jnp.float32) + ob_ref[...]
    _store_universal(o_ref, outv * mask, hw)


# ---------------------------------------------------------------------------
# Pallas wrappers (jitted per static signature -> compiled kernels are reused)
# ---------------------------------------------------------------------------
@partial(jax.jit, static_argnames=("meta", "hw", "epilogue"))
def _run_chain(x, mask, wbs, *, meta, hw, epilogue=None):
    B, Cin0, Lpad = x.shape
    H, W, P, Wp, Lc, _, base = hw
    n = len(meta)
    cout_last = Cin0 if epilogue == "scale" else meta[-1][5]
    n_scratch = min(n - 1, 2)
    cbuf = max((m[5] for m in meta[:-1]), default=1)

    in_specs = [pl.BlockSpec((None, Cin0, Lpad), lambda i: (i, 0, 0)),
                pl.BlockSpec((1, Lc), lambda i: (0, 0))]
    for j in range(n):
        in_specs.append(pl.BlockSpec(wbs[2 * j].shape, lambda i: (0, 0)))
        in_specs.append(pl.BlockSpec(wbs[2 * j + 1].shape, lambda i: (0, 0)))

    flops = int(sum(2 * m[5] * m[4] * m[0] * m[0] * Lc for m in meta) * B)
    bytes_acc = int(4 * B * (Cin0 + cout_last) * Lpad
                    + 2 * sum(wbs[2 * j].size for j in range(n)))

    return pl.pallas_call(
        partial(_chain_kernel, meta=meta, hw=hw, epilogue=epilogue),
        grid=(B,),
        out_shape=jax.ShapeDtypeStruct((B, cout_last, Lpad), jnp.float32),
        in_specs=in_specs,
        out_specs=pl.BlockSpec((None, cout_last, Lpad), lambda i: (i, 0, 0)),
        scratch_shapes=[pltpu.VMEM((cbuf, Lpad), jnp.float32) for _ in range(n_scratch)],
        compiler_params=pltpu.CompilerParams(dimension_semantics=("parallel",)),
        cost_estimate=pl.CostEstimate(flops=flops, transcendentals=0,
                                      bytes_accessed=bytes_acc),
    )(x, mask, *wbs)


def chain_fwd(layers, x, hw, mask, epilogue=None):
    """Run a fused chain of conv layers (list of packed layer dicts) in one Pallas launch."""
    meta = tuple((l["k"], l["pad"], l["act"], l["res"], l["cin"], l["cout"]) for l in layers)
    wbs = tuple(a for l in layers for a in (l["w"], l["b"]))
    return _run_chain(x, mask, wbs, meta=meta, hw=hw, epilogue=epilogue)


@partial(jax.jit, static_argnames=("ks", "pads", "hw"))
def _run_adaptive(x, spa, spe, mask, ow, ob, *, ks, pads, hw):
    B, C, Lpad = x.shape
    TT = spe.shape[2]
    Lc = hw[4]
    cout = ow.shape[0]
    flops = int(B * (3 * C * TT * Lc + 2 * cout * 3 * C * 9 * Lc))
    return pl.pallas_call(
        partial(_adaptive_kernel, ks=ks, pads=pads, hw=hw),
        grid=(B,),
        out_shape=jax.ShapeDtypeStruct((B, cout, Lpad), jnp.float32),
        in_specs=[pl.BlockSpec((None, C, Lpad), lambda i: (i, 0, 0)),
                  pl.BlockSpec((None, TT, Lpad), lambda i: (i, 0, 0)),
                  pl.BlockSpec((None, C, TT), lambda i: (i, 0, 0)),
                  pl.BlockSpec((1, Lc), lambda i: (0, 0)),
                  pl.BlockSpec(ow.shape, lambda i: (0, 0)),
                  pl.BlockSpec(ob.shape, lambda i: (0, 0))],
        out_specs=pl.BlockSpec((None, cout, Lpad), lambda i: (i, 0, 0)),
        scratch_shapes=[pltpu.VMEM((3 * C, Lpad), jnp.float32)],
        compiler_params=pltpu.CompilerParams(dimension_semantics=("parallel",)),
        cost_estimate=pl.CostEstimate(
            flops=flops, transcendentals=0,
            bytes_accessed=int(4 * B * ((C + TT + cout) * Lpad + C * TT))),
    )(x, spa, spe, mask, ow, ob)


# ---------------------------------------------------------------------------
# Tiny / pure-data-movement pieces kept in plain JAX (a Pallas launch would cost more)
# ---------------------------------------------------------------------------
@partial(jax.jit, static_argnames=("ks", "hw"))
def spectral_kernels(x, branches, *, ks, hw):
    """GAP + tiny SE branches -> raw (B, C, sum(k^2)) spectral kernels."""
    H, W = hw[0], hw[1]
    B, C = x.shape[0], x.shape[1]
    g0 = jnp.sum(x, axis=2) / float(H * W)             # zero halo -> sum/(H*W) == GAP
    outs = []
    for i, k in enumerate(ks):
        br = branches[i]
        g = g0 @ br["w1"].T + br["b1"]
        g = jnp.where(g >= 0, g, 0.2 * g)               # LeakyReLU(0.2)
        g = g @ br["w2"].T + br["b2"]
        outs.append(g.reshape(B, C, k * k))
    return jnp.concatenate(outs, axis=-1)


@partial(jax.jit, static_argnames=("ks", "stride", "pad"))
def unfold(x, ks, stride, pad):
    # TODO(synk): GSB unfold/fold + transposes stay as plain XLA data movement (16 patches).
    B, C, H, W = x.shape
    xp = jnp.pad(x, ((0, 0), (0, 0), (pad, pad), (pad, pad)))
    Ho = (H + 2 * pad - ks) // stride + 1
    Wo = (W + 2 * pad - ks) // stride + 1
    cols = []
    for i in range(Ho):
        for j in range(Wo):
            patch = xp[:, :, i * stride:i * stride + ks, j * stride:j * stride + ks]
            cols.append(patch.reshape(B, C * ks * ks, 1))
    return jnp.concatenate(cols, axis=2)


@partial(jax.jit, static_argnames=("out_size", "ks", "stride", "pad"))
def fold(cols, out_size, ks, stride, pad):
    B = cols.shape[0]
    H, W = out_size
    C = cols.shape[1] // (ks * ks)
    Ho = (H + 2 * pad - ks) // stride + 1
    Wo = (W + 2 * pad - ks) // stride + 1
    out = jnp.zeros((B, C, H + 2 * pad, W + 2 * pad), jnp.float32)
    c4 = cols.reshape(B, C, ks, ks, Ho * Wo)
    idx = 0
    for i in range(Ho):
        for j in range(Wo):
            out = out.at[:, :, i * stride:i * stride + ks,
                         j * stride:j * stride + ks].add(c4[..., idx])
            idx += 1
    if pad > 0:
        out = out[:, :, pad:H + pad, pad:W + pad]
    return out


# ---------------------------------------------------------------------------
# Deterministic parameter init.  dw+1x1 pairs are folded; weights are packed tap-stacked bf16.
# ---------------------------------------------------------------------------
class ParamGen:
    def __init__(self, seed=0):
        self._key = jax.random.PRNGKey(seed)
        self._i = 0

    def take(self, shape, scale=0.1):
        self._i += 1
        k = jax.random.fold_in(self._key, self._i)
        return scale * jax.random.normal(k, shape, dtype=jnp.float32)


def _pack(w, b, k, pad, act, res):
    """(Cout, Cin, k, k) -> (Cout, k*k*Cin) bf16 (tap-major, channel within tap)."""
    cout, cin = w.shape[0], w.shape[1]
    wp = jnp.transpose(w.reshape(cout, cin, k * k), (0, 2, 1)).reshape(cout, k * k * cin)
    return {"w": wp.astype(jnp.bfloat16), "b": b.reshape(cout, 1).astype(jnp.float32),
            "k": k, "pad": pad, "act": act, "res": res, "cin": cin, "cout": cout}


def dense_layer(pg, cin, cout, k, pad, act="none", res=False):
    return _pack(pg.take((cout, cin, k, k)), pg.take((cout,), 0.02), k, pad, act, res)


def dwpw_layer(pg, cin, cmid, cout, k, pad, groups=None, act="none", res=False):
    """Sequential(grouped kxk conv, 1x1 conv) algebraically folded into ONE dense kxk conv
    (exact: the reference model has no nonlinearity between the two convs of any such pair)."""
    groups = cin if groups is None else groups
    cin_g, cmid_g = cin // groups, cmid // groups
    dw_w = pg.take((cmid, cin_g, k, k))
    dw_b = pg.take((cmid,), 0.02)
    pw_w = pg.take((cout, cmid, 1, 1)).reshape(cout, cmid)
    pw_b = pg.take((cout,), 0.02)
    eye = jnp.eye(groups, dtype=jnp.float32)
    dw_dense = jnp.einsum('gh,gocij->gohcij', eye,
                          dw_w.reshape(groups, cmid_g, cin_g, k, k)).reshape(cmid, cin, k, k)
    w_f = jnp.einsum('om,mcij->ocij', pw_w, dw_dense)
    b_f = pw_b + pw_w @ dw_b
    return _pack(w_f, b_f, k, pad, act, res)


def init_resblock(pg, ch, k=3, pad=1):
    # chain: conv1(+ReLU), conv2(+residual from chain input)
    return [dwpw_layer(pg, ch, ch, ch, k, pad, act="relu"),
            dwpw_layer(pg, ch, ch, ch, k, pad, act="none", res=True)]


def init_ff(pg, d):
    # FeatureFusion = 2 resblocks + 1x1 conv, fused into one 5-layer chain
    return init_resblock(pg, d) + init_resblock(pg, d) + [dense_layer(pg, d, d, 1, 0)]


def init_gsb(pg, dim, inner_dim, head_n_blocks=1, ngroups=8, patch_num=4):
    pnum = patch_num ** 2
    return {"up": dwpw_layer(pg, dim, inner_dim, inner_dim, 3, 1, groups=dim),
            "head": [init_resblock(pg, inner_dim) for _ in range(head_n_blocks)],
            "ff": [init_ff(pg, inner_dim // ngroups) for _ in range(ngroups)],
            "tail": dwpw_layer(pg, inner_dim, inner_dim, inner_dim, 3, 1),
            "sf": dwpw_layer(pg, pnum, pnum, pnum, 5, 2),
            "ngroups": ngroups, "patch_num": patch_num}


def init_hgk_block(pg, in_channels, channels, if_proj):
    ks, pads = (1, 3, 5), (0, 1, 2)
    mid = int(channels * 0.5)
    p = {"C": channels, "ks": ks, "pads": pads, "if_proj": if_proj,
         "attn": [dense_layer(pg, channels * 2, channels, 1, 0, act="relu"),
                  dense_layer(pg, channels, 2, 1, 0, act="sigmoid")],
         "spatial": [], "spectral": []}
    for k, pad in zip(ks, pads):
        k2 = k * k
        p["spatial"].append([dwpw_layer(pg, channels, channels, k2, k, pad),
                             dwpw_layer(pg, k2, k2, k2, k, pad, act="lrelu"),
                             dwpw_layer(pg, k2, k2, k2, k, pad)])
        p["spectral"].append({"w1": pg.take((mid, channels)), "b1": pg.take((mid,), 0.02),
                              "w2": pg.take((channels * k2, mid)),
                              "b2": pg.take((channels * k2,), 0.02)})
    outp = _pack(pg.take((channels, channels * 3, 3, 3)), pg.take((channels,), 0.02),
                 3, 1, "none", False)
    p["out_w"], p["out_b"] = outp["w"], outp["b"]
    if if_proj:
        p["proj"] = [dense_layer(pg, in_channels, channels, 3, 1, act="relu"),
                     dense_layer(pg, channels, channels, 3, 1, act="relu"),
                     dense_layer(pg, channels, channels, 5, 2)]
    return p


# TODO(synk): MergeFusion is referenced by HGKNet2 but its definition is not in the provided
# source; approximated as Conv3x3(in->mid) + ReLU + Conv3x3(mid->out) in one fused chain.
def init_merge_fusion(pg, cin, cmid, cout):
    return [dense_layer(pg, cin, cmid, 3, 1, act="relu"),
            dense_layer(pg, cmid, cout, 3, 1)]


def init_hgknet2(pg, in_ms_cnum=8, in_pan_cnum=1, block_num=4, hidden_dim=8):
    n_groups = in_ms_cnum
    assert hidden_dim % n_groups == 0
    p = {"cfg": dict(in_ms_cnum=in_ms_cnum, block_num=block_num,
                     hidden_dim=hidden_dim, n_groups=n_groups)}
    p["pan_proj"] = [dense_layer(pg, 1, hidden_dim, 3, 1, act="relu"),
                     dense_layer(pg, hidden_dim, hidden_dim, 3, 1, act="relu"),
                     dense_layer(pg, hidden_dim, hidden_dim, 5, 2)]
    p["band_nets"] = [[init_hgk_block(pg, 1, hidden_dim, j == 0)
                       for j in range(block_num)] for _ in range(in_ms_cnum)]
    p["gsb"] = [init_gsb(pg, hidden_dim * n_groups, hidden_dim * n_groups)
                for _ in range(block_num)]
    p["merge"] = [init_merge_fusion(pg, hidden_dim * n_groups * 2,
                                    hidden_dim * n_groups, hidden_dim * n_groups)
                  for _ in range(block_num - 1)]
    p["tail"] = dense_layer(pg, hidden_dim * n_groups, in_ms_cnum, 3, 1)
    return p


# ---------------------------------------------------------------------------
# Functional modules mirroring the PyTorch reference (all features in universal layout)
# ---------------------------------------------------------------------------
def gsb_fwd(p, x, H, W, hw, mask):
    x = chain_fwd([p["up"]], x, hw, mask)
    for rb in p["head"]:
        x = chain_fwd(rb, x, hw, mask)
    ng = p["ngroups"]
    # TODO(synk): the 8 per-group FeatureFusions could be batched into one block-diagonal launch.
    xs = jnp.concatenate([chain_fwd(p["ff"][i], x[:, i::ng], hw, mask)
                          for i in range(ng)], axis=1)
    xs = chain_fwd([p["tail"]], xs, hw, mask)
    b, c = xs.shape[0], xs.shape[1]
    ps = int(3 / 8 * H)
    stride, padding = int(2 / 3 * ps), int(1 / 3 * ps)
    pn2 = p["patch_num"] ** 2
    xs_img = to_img(xs, H, W)
    sf = unfold(xs_img, ps, stride, padding)                   # (b, c*ps*ps, 16)
    sf = sf.reshape(b * c, ps, ps, pn2)
    sf = jnp.transpose(sf, (0, 3, 1, 2))                       # (b*c, 16, ps, ps)
    hwp = _hwkey(ps, ps)
    maskp = _make_mask(hwp)
    sf = chain_fwd([p["sf"]], from_img(sf), hwp, maskp)
    sf = to_img(sf, ps, ps)
    sf = jnp.transpose(sf, (0, 2, 3, 1)).reshape(b, c * ps * ps, pn2)
    sf = fold(sf, (H, W), ps, stride, padding)
    return xs + from_img(sf)


def hgk_block_fwd(p, lms, pan, hw, mask):
    if p["if_proj"]:
        lms = chain_fwd(p["proj"], lms, hw, mask)
    C = p["C"]
    xy = jnp.concatenate([lms, pan], axis=1)
    # attention chain + attention multiply fused in one launch -> [x*a1 ; y*a2]
    xy_s = chain_fwd(p["attn"], xy, hw, mask, epilogue="scale")
    x_s, y_s = xy_s[:, :C], xy_s[:, C:]
    spa = jnp.concatenate([chain_fwd(p["spatial"][i], y_s, hw, mask)
                           for i in range(len(p["ks"]))], axis=1)   # (B, 35, Lpad)
    spe = spectral_kernels(x_s, p["spectral"], ks=p["ks"], hw=hw)   # (B, C, 35)
    # KernelNorms + 3 adaptive convs + out_conv fused in one launch
    return _run_adaptive(x_s, spa, spe, mask, p["out_w"], p["out_b"],
                         ks=p["ks"], pads=p["pads"], hw=hw)


def hgknet2_fwd(p, lms, pan):
    cfg = p["cfg"]
    B, _, H, W = pan.shape
    hw = _hwkey(H, W)
    mask = _make_mask(hw)
    lms_f = from_img(lms)
    pan_f = chain_fwd(p["pan_proj"], from_img(pan), hw, mask)
    band_flist = []
    for c_i in range(cfg["in_ms_cnum"]):
        band_f = lms_f[:, c_i:c_i + 1]
        blocks = []
        for b_i in range(cfg["block_num"]):
            band_f = hgk_block_fwd(p["band_nets"][c_i][b_i], band_f, pan_f, hw, mask)
            blocks.append(band_f)
        band_flist.append(blocks)
    last_f = None
    for b_i in range(cfg["block_num"] - 1):
        if b_i == 0:
            last_f = jnp.concatenate([band_flist[c][0] for c in range(cfg["in_ms_cnum"])], axis=1)
            last_f = gsb_fwd(p["gsb"][0], last_f, H, W, hw, mask)
        cur_f = jnp.concatenate([band_flist[c][b_i + 1] for c in range(cfg["in_ms_cnum"])], axis=1)
        cur_f = gsb_fwd(p["gsb"][b_i + 1], cur_f, H, W, hw, mask)
        last_f = jnp.concatenate([last_f, cur_f], axis=1)
        last_f = chain_fwd(p["merge"][b_i], last_f, hw, mask)
    out_f = chain_fwd([p["tail"]], last_f, hw, mask)
    return to_img(out_f, H, W)


# ---------------------------------------------------------------------------
# main
# ---------------------------------------------------------------------------
if __name__ == "__main__":
    B, H, W = 2, 16, 16
    in_ms_cnum, block_num, hidden_dim = 2, 2, 4   # hidden_dim % n_groups == 0; GSB dim = 8

    pg = ParamGen(0)
    params = init_hgknet2(pg, in_ms_cnum=in_ms_cnum, in_pan_cnum=1,
                          block_num=block_num, hidden_dim=hidden_dim)

    key = jax.random.PRNGKey(0)
    k1, k2 = jax.random.split(key)
    lms = jax.random.normal(k1, (B, in_ms_cnum, H, W), dtype=jnp.float32)
    pan = jax.random.normal(k2, (B, 1, H, W), dtype=jnp.float32)

    out = hgknet2_fwd(params, lms, pan)
    out = jax.block_until_ready(out)
    assert out.shape == (B, in_ms_cnum, H, W)
    assert bool(jnp.all(jnp.isfinite(out)))
    print("KERNEL_OK")
</pallas_src>

<mosaic_0001>
module attributes {stable_mosaic.version = 11 : i64} {
  func.func @_chain_kernel(%arg0: i32, %arg1: memref<1x1x404xf32, #tpu.memory_space<vmem>>, %arg2: memref<1x320xf32, #tpu.memory_space<vmem>>, %arg3: memref<4x9xbf16, #tpu.memory_space<vmem>>, %arg4: memref<4x1xf32, #tpu.memory_space<vmem>>, %arg5: memref<4x36xbf16, #tpu.memory_space<vmem>>, %arg6: memref<4x1xf32, #tpu.memory_space<vmem>>, %arg7: memref<4x100xbf16, #tpu.memory_space<vmem>>, %arg8: memref<4x1xf32, #tpu.memory_space<vmem>>, %arg9: memref<1x4x404xf32, #tpu.memory_space<vmem>>, %arg10: memref<4x404xf32, #tpu.memory_space<vmem>>, %arg11: memref<4x404xf32, #tpu.memory_space<vmem>>) attributes {dimension_semantics = [#tpu.dimension_semantics<parallel>], iteration_bounds = array<i64: 2>, scalar_prefetch = 0 : i64, scratch_operands = 2 : i64, tpu.core_type = #tpu.core_type<tc>, window_params = [{transform_indices = @transform_0, window_bounds = array<i64: 1, 1, 404>}, {pipeline_mode = #tpu.pipeline_mode<synchronous>, transform_indices = @transform_1, window_bounds = array<i64: 1, 320>}, {pipeline_mode = #tpu.pipeline_mode<synchronous>, transform_indices = @transform_2, window_bounds = array<i64: 4, 9>}, {pipeline_mode = #tpu.pipeline_mode<synchronous>, transform_indices = @transform_3, window_bounds = array<i64: 4, 1>}, {pipeline_mode = #tpu.pipeline_mode<synchronous>, transform_indices = @transform_4, window_bounds = array<i64: 4, 36>}, {pipeline_mode = #tpu.pipeline_mode<synchronous>, transform_indices = @transform_5, window_bounds = array<i64: 4, 1>}, {pipeline_mode = #tpu.pipeline_mode<synchronous>, transform_indices = @transform_6, window_bounds = array<i64: 4, 100>}, {pipeline_mode = #tpu.pipeline_mode<synchronous>, transform_indices = @transform_7, window_bounds = array<i64: 4, 1>}, {transform_indices = @transform_8, window_bounds = array<i64: 1, 4, 404>}]} {
    %c0 = arith.constant 0 : index
    %c0_0 = arith.constant 0 : index
    %0 = vector.load %arg2[%c0, %c0_0] : memref<1x320xf32, #tpu.memory_space<vmem>>, vector<1x320xf32>
    %cst = arith.constant 0.000000e+00 : f32
    %1 = vector.broadcast %cst : f32 to vector<4x42xf32>
    %c0_1 = arith.constant 0 : index
    %c0_2 = arith.constant 0 : index
    %2 = vector.load %arg10[%c0_1, %c0_2] : memref<4x404xf32, #tpu.memory_space<vmem>>, vector<4x42xf32>
    tpu.vector_store %arg10[%c0_1, %c0_2], %1 {strides = array<i32>} : memref<4x404xf32, #tpu.memory_space<vmem>>, vector<4x42xf32>,
    %c0_3 = arith.constant 0 : index
    %c362 = arith.constant 362 : index
    %3 = vector.load %arg10[%c0_3, %c362] : memref<4x404xf32, #tpu.memory_space<vmem>>, vector<4x42xf32>
    tpu.vector_store %arg10[%c0_3, %c362], %1 {strides = array<i32>} : memref<4x404xf32, #tpu.memory_space<vmem>>, vector<4x42xf32>,
    %cst_4 = arith.constant 0.000000e+00 : f32
    %4 = vector.broadcast %cst_4 : f32 to vector<4x42xf32>
    %c0_5 = arith.constant 0 : index
    %c0_6 = arith.constant 0 : index
    %5 = vector.load %arg11[%c0_5, %c0_6] : memref<4x404xf32, #tpu.memory_space<vmem>>, vector<4x42xf32>
    tpu.vector_store %arg11[%c0_5, %c0_6], %4 {strides = array<i32>} : memref<4x404xf32, #tpu.memory_space<vmem>>, vector<4x42xf32>,
    %c0_7 = arith.constant 0 : index
    %c362_8 = arith.constant 362 : index
    %6 = vector.load %arg11[%c0_7, %c362_8] : memref<4x404xf32, #tpu.memory_space<vmem>>, vector<4x42xf32>
    tpu.vector_store %arg11[%c0_7, %c362_8], %4 {strides = array<i32>} : memref<4x404xf32, #tpu.memory_space<vmem>>, vector<4x42xf32>,
    %c0_9 = arith.constant 0 : index
    %c0_10 = arith.constant 0 : index
    %c21 = arith.constant 21 : index
    %7 = vector.load %arg1[%c0_9, %c0_10, %c21] : memref<1x1x404xf32, #tpu.memory_space<vmem>>, vector<1x1x320xf32>
    %8 = vector.shape_cast %7 : vector<1x1x320xf32> to vector<1x320xf32>
    %c0_11 = arith.constant 0 : index
    %c0_12 = arith.constant 0 : index
    %c22 = arith.constant 22 : index
    %9 = vector.load %arg1[%c0_11, %c0_12, %c22] : memref<1x1x404xf32, #tpu.memory_space<vmem>>, vector<1x1x320xf32>
    %10 = vector.shape_cast %9 : vector<1x1x320xf32> to vector<1x320xf32>
    %c0_13 = arith.constant 0 : index
    %c0_14 = arith.constant 0 : index
    %c23 = arith.constant 23 : index
    %11 = vector.load %arg1[%c0_13, %c0_14, %c23] : memref<1x1x404xf32, #tpu.memory_space<vmem>>, vector<1x1x320xf32>
    %12 = vector.shape_cast %11 : vector<1x1x320xf32> to vector<1x320xf32>
    %c0_15 = arith.constant 0 : index
    %c0_16 = arith.constant 0 : index
    %c41 = arith.constant 41 : index
    %13 = vector.load %arg1[%c0_15, %c0_16, %c41] : memref<1x1x404xf32, #tpu.memory_space<vmem>>, vector<1x1x320xf32>
    %14 = vector.shape_cast %13 : vector<1x1x320xf32> to vector<1x320xf32>
    %c0_17 = arith.constant 0 : index
    %c0_18 = arith.constant 0 : index
    %c42 = arith.constant 42 : index
    %15 = vector.load %arg1[%c0_17, %c0_18, %c42] : memref<1x1x404xf32, #tpu.memory_space<vmem>>, vector<1x1x320xf32>
    %16 = vector.shape_cast %15 : vector<1x1x320xf32> to vector<1x320xf32>
    %c0_19 = arith.constant 0 : index
    %c0_20 = arith.constant 0 : index
    %c43 = arith.constant 43 : index
    %17 = vector.load %arg1[%c0_19, %c0_20, %c43] : memref<1x1x404xf32, #tpu.memory_space<vmem>>, vector<1x1x320xf32>
    %18 = vector.shape_cast %17 : vector<1x1x320xf32> to vector<1x320xf32>
    %c0_21 = arith.constant 0 : index
    %c0_22 = arith.constant 0 : index
    %c61 = arith.constant 61 : index
    %19 = vector.load %arg1[%c0_21, %c0_22, %c61] : memref<1x1x404xf32, #tpu.memory_space<vmem>>, vector<1x1x320xf32>
    %20 = vector.shape_cast %19 : vector<1x1x320xf32> to vector<1x320xf32>
    %c0_23 = arith.constant 0 : index
    %c0_24 = arith.constant 0 : index
    %c62 = arith.constant 62 : index
    %21 = vector.load %arg1[%c0_23, %c0_24, %c62] : memref<1x1x404xf32, #tpu.memory_space<vmem>>, vector<1x1x320xf32>
    %22 = vector.shape_cast %21 : vector<1x1x320xf32> to vector<1x320xf32>
    %c0_25 = arith.constant 0 : index
    %c0_26 = arith.constant 0 : index
    %c63 = arith.constant 63 : index
    %23 = vector.load %arg1[%c0_25, %c0_26, %c63] : memref<1x1x404xf32, #tpu.memory_space<vmem>>, vector<1x1x320xf32>
    %24 = vector.shape_cast %23 : vector<1x1x320xf32> to vector<1x320xf32>
    %25 = tpu.concatenate %8, %10, %12, %14, %16, %18, %20, %22, %24 in 0 : vector<1x320xf32>, vector<1x320xf32>, vector<1x320xf32>, vector<1x320xf32>, vector<1x320xf32>, vector<1x320xf32>, vector<1x320xf32>, vector<1x320xf32>, vector<1x320xf32> -> vector<9x320xf32>
    %c0_27 = arith.constant 0 : index
    %c0_28 = arith.constant 0 : index
    %26 = vector.load %arg3[%c0_27, %c0_28] : memref<4x9xbf16, #tpu.memory_space<vmem>>, vector<4x9xbf16>
    %27 = arith.truncf %25 : vector<9x320xf32> to vector<9x320xbf16>
    %cst_29 = arith.constant dense<0.000000e+00> : vector<4x320xf32>
    %28 = tpu.matmul %26, %27, %cst_29 {dimension_numbers = #tpu.dot_dimension_numbers<[1], [0], [0], [1], [0, 0, 1, 1], [], []>} : vector<4x9xbf16>, vector<9x320xbf16>, vector<4x320xf32> -> vector<4x320xf32>
    %c0_30 = arith.constant 0 : index
    %c0_31 = arith.constant 0 : index
    %29 = vector.load %arg4[%c0_30, %c0_31] : memref<4x1xf32, #tpu.memory_space<vmem>>, vector<4x1xf32>
    %30 = vector.broadcast %29 : vector<4x1xf32> to vector<4x320xf32>
    %31 = arith.addf %28, %30 : vector<4x320xf32>
    %cst_32 = arith.constant 0.000000e+00 : f32
    %32 = vector.broadcast %cst_32 : f32 to vector<4x320xf32>
    %33 = arith.maximumf %31, %32 : vector<4x320xf32>
    %34 = vector.broadcast %0 : vector<1x320xf32> to vector<4x320xf32>
    %35 = arith.mulf %33, %34 : vector<4x320xf32>
    %c0_33 = arith.constant 0 : index
    %c42_34 = arith.constant 42 : index
    %36 = vector.load %arg10[%c0_33, %c42_34] : memref<4x404xf32, #tpu.memory_space<vmem>>, vector<4x320xf32>
    tpu.vector_store %arg10[%c0_33, %c42_34], %35 {strides = array<i32>} : memref<4x404xf32, #tpu.memory_space<vmem>>, vector<4x320xf32>,
    %c0_35 = arith.constant 0 : index
    %c21_36 = arith.constant 21 : index
    %37 = vector.load %arg10[%c0_35, %c21_36] : memref<4x404xf32, #tpu.memory_space<vmem>>, vector<4x320xf32>
    %c0_37 = arith.constant 0 : index
    %c22_38 = arith.constant 22 : index
    %38 = vector.load %arg10[%c0_37, %c22_38] : memref<4x404xf32, #tpu.memory_space<vmem>>, vector<4x320xf32>
    %c0_39 = arith.constant 0 : index
    %c23_40 = arith.constant 23 : index
    %39 = vector.load %arg10[%c0_39, %c23_40] : memref<4x404xf32, #tpu.memory_space<vmem>>, vector<4x320xf32>
    %c0_41 = arith.constant 0 : index
    %c41_42 = arith.constant 41 : index
    %40 = vector.load %arg10[%c0_41, %c41_42] : memref<4x404xf32, #tpu.memory_space<vmem>>, vector<4x320xf32>
    %c0_43 = arith.constant 0 : index
    %c42_44 = arith.constant 42 : index
    %41 = vector.load %arg10[%c0_43, %c42_44] : memref<4x404xf32, #tpu.memory_space<vmem>>, vector<4x320xf32>
    %c0_45 = arith.constant 0 : index
    %c43_46 = arith.constant 43 : index
    %42 = vector.load %arg10[%c0_45, %c43_46] : memref<4x404xf32, #tpu.memory_space<vmem>>, vector<4x320xf32>
    %c0_47 = arith.constant 0 : index
    %c61_48 = arith.constant 61 : index
    %43 = vector.load %arg10[%c0_47, %c61_48] : memref<4x404xf32, #tpu.memory_space<vmem>>, vector<4x320xf32>
    %c0_49 = arith.constant 0 : index
    %c62_50 = arith.constant 62 : index
    %44 = vector.load %arg10[%c0_49, %c62_50] : memref<4x404xf32, #tpu.memory_space<vmem>>, vector<4x320xf32>
    %c0_51 = arith.constant 0 : index
    %c63_52 = arith.constant 63 : index
    %45 = vector.load %arg10[%c0_51, %c63_52] : memref<4x404xf32, #tpu.memory_space<vmem>>, vector<4x320xf32>
    %46 = tpu.concatenate %37, %38, %39, %40, %41, %42, %43, %44, %45 in 0 : vector<4x320xf32>, vector<4x320xf32>, vector<4x320xf32>, vector<4x320xf32>, vector<4x320xf32>, vector<4x320xf32>, vector<4x320xf32>, vector<4x320xf32>, vector<4x320xf32> -> vector<36x320xf32>
    %c0_53 = arith.constant 0 : index
    %c0_54 = arith.constant 0 : index
    %47 = vector.load %arg5[%c0_53, %c0_54] : memref<4x36xbf16, #tpu.memory_space<vmem>>, vector<4x36xbf16>
    %48 = arith.truncf %46 : vector<36x320xf32> to vector<36x320xbf16>
    %cst_55 = arith.constant dense<0.000000e+00> : vector<4x320xf32>
    %49 = tpu.matmul %47, %48, %cst_55 {dimension_numbers = #tpu.dot_dimension_numbers<[1], [0], [0], [1], [0, 0, 1, 1], [], []>} : vector<4x36xbf16>, vector<36x320xbf16>, vector<4x320xf32> -> vector<4x320xf32>
    %c0_56 = arith.constant 0 : index
    %c0_57 = arith.constant 0 : index
    %50 = vector.load %arg6[%c0_56, %c0_57] : memref<4x1xf32, #tpu.memory_space<vmem>>, vector<4x1xf32>
    %51 = vector.broadcast %50 : vector<4x1xf32> to vector<4x320xf32>
    %52 = arith.addf %49, %51 : vector<4x320xf32>
    %cst_58 = arith.constant 0.000000e+00 : f32
    %53 = vector.broadcast %cst_58 : f32 to vector<4x320xf32>
    %54 = arith.maximumf %52, %53 : vector<4x320xf32>
    %55 = vector.broadcast %0 : vector<1x320xf32> to vector<4x320xf32>
    %56 = arith.mulf %54, %55 : vector<4x320xf32>
    %c0_59 = arith.constant 0 : index
    %c42_60 = arith.constant 42 : index
    %57 = vector.load %arg11[%c0_59, %c42_60] : memref<4x404xf32, #tpu.memory_space<vmem>>, vector<4x320xf32>
    tpu.vector_store %arg11[%c0_59, %c42_60], %56 {strides = array<i32>} : memref<4x404xf32, #tpu.memory_space<vmem>>, vector<4x320xf32>,
    %c0_61 = arith.constant 0 : index
    %c0_62 = arith.constant 0 : index
    %58 = vector.load %arg11[%c0_61, %c0_62] : memref<4x404xf32, #tpu.memory_space<vmem>>, vector<4x320xf32>
    %c0_63 = arith.constant 0 : index
    %c1 = arith.constant 1 : index
    %59 = vector.load %arg11[%c0_63, %c1] : memref<4x404xf32, #tpu.memory_space<vmem>>, vector<4x320xf32>
    %c0_64 = arith.constant 0 : index
    %c2 = arith.constant 2 : index
    %60 = vector.load %arg11[%c0_64, %c2] : memref<4x404xf32, #tpu.memory_space<vmem>>, vector<4x320xf32>
    %c0_65 = arith.constant 0 : index
    %c3 = arith.constant 3 : index
    %61 = vector.load %arg11[%c0_65, %c3] : memref<4x404xf32, #tpu.memory_space<vmem>>, vector<4x320xf32>
    %c0_66 = arith.constant 0 : index
    %c4 = arith.constant 4 : index
    %62 = vector.load %arg11[%c0_66, %c4] : memref<4x404xf32, #tpu.memory_space<vmem>>, vector<4x320xf32>
    %c0_67 = arith.constant 0 : index
    %c20 = arith.constant 20 : index
    %63 = vector.load %arg11[%c0_67, %c20] : memref<4x404xf32, #tpu.memory_space<vmem>>, vector<4x320xf32>
    %c0_68 = arith.constant 0 : index
    %c21_69 = arith.constant 21 : index
    %64 = vector.load %arg11[%c0_68, %c21_69] : memref<4x404xf32, #tpu.memory_space<vmem>>, vector<4x320xf32>
    %c0_70 = arith.constant 0 : index
    %c22_71 = arith.constant 22 : index
    %65 = vector.load %arg11[%c0_70, %c22_71] : memref<4x404xf32, #tpu.memory_space<vmem>>, vector<4x320xf32>
    %c0_72 = arith.constant 0 : index
    %c23_73 = arith.constant 23 : index
    %66 = vector.load %arg11[%c0_72, %c23_73] : memref<4x404xf32, #tpu.memory_space<vmem>>, vector<4x320xf32>
    %c0_74 = arith.constant 0 : index
    %c24 = arith.constant 24 : index
    %67 = vector.load %arg11[%c0_74, %c24] : memref<4x404xf32, #tpu.memory_space<vmem>>, vector<4x320xf32>
    %c0_75 = arith.constant 0 : index
    %c40 = arith.constant 40 : index
    %68 = vector.load %arg11[%c0_75, %c40] : memref<4x404xf32, #tpu.memory_space<vmem>>, vector<4x320xf32>
    %c0_76 = arith.constant 0 : index
    %c41_77 = arith.constant 41 : index
    %69 = vector.load %arg11[%c0_76, %c41_77] : memref<4x404xf32, #tpu.memory_space<vmem>>, vector<4x320xf32>
    %c0_78 = arith.constant 0 : index
    %c42_79 = arith.constant 42 : index
    %70 = vector.load %arg11[%c0_78, %c42_79] : memref<4x404xf32, #tpu.memory_space<vmem>>, vector<4x320xf32>
    %c0_80 = arith.constant 0 : index
    %c43_81 = arith.constant 43 : index
    %71 = vector.load %arg11[%c0_80, %c43_81] : memref<4x404xf32, #tpu.memory_space<vmem>>, vector<4x320xf32>
    %c0_82 = arith.constant 0 : index
    %c44 = arith.constant 44 : index
    %72 = vector.load %arg11[%c0_82, %c44] : memref<4x404xf32, #tpu.memory_space<vmem>>, vector<4x320xf32>
    %c0_83 = arith.constant 0 : index
    %c60 = arith.constant 60 : index
    %73 = vector.load %arg11[%c0_83, %c60] : memref<4x404xf32, #tpu.memory_space<vmem>>, vector<4x320xf32>
    %c0_84 = arith.constant 0 : index
    %c61_85 = arith.constant 61 : index
    %74 = vector.load %arg11[%c0_84, %c61_85] : memref<4x404xf32, #tpu.memory_space<vmem>>, vector<4x320xf32>
    %c0_86 = arith.constant 0 : index
    %c62_87 = arith.constant 62 : index
    %75 = vector.load %arg11[%c0_86, %c62_87] : memref<4x404xf32, #tpu.memory_space<vmem>>, vector<4x320xf32>
    %c0_88 = arith.constant 0 : index
    %c63_89 = arith.constant 63 : index
    %76 = vector.load %arg11[%c0_88, %c63_89] : memref<4x404xf32, #tpu.memory_space<vmem>>, vector<4x320xf32>
    %c0_90 = arith.constant 0 : index
    %c64 = arith.constant 64 : index
    %77 = vector.load %arg11[%c0_90, %c64] : memref<4x404xf32, #tpu.memory_space<vmem>>, vector<4x320xf32>
    %c0_91 = arith.constant 0 : index
    %c80 = arith.constant 80 : index
    %78 = vector.load %arg11[%c0_91, %c80] : memref<4x404xf32, #tpu.memory_space<vmem>>, vector<4x320xf32>
    %c0_92 = arith.constant 0 : index
    %c81 = arith.constant 81 : index
    %79 = vector.load %arg11[%c0_92, %c81] : memref<4x404xf32, #tpu.memory_space<vmem>>, vector<4x320xf32>
    %c0_93 = arith.constant 0 : index
    %c82 = arith.constant 82 : index
    %80 = vector.load %arg11[%c0_93, %c82] : memref<4x404xf32, #tpu.memory_space<vmem>>, vector<4x320xf32>
    %c0_94 = arith.constant 0 : index
    %c83 = arith.constant 83 : index
    %81 = vector.load %arg11[%c0_94, %c83] : memref<4x404xf32, #tpu.memory_space<vmem>>, vector<4x320xf32>
    %c0_95 = arith.constant 0 : index
    %c84 = arith.constant 84 : index
    %82 = vector.load %arg11[%c0_95, %c84] : memref<4x404xf32, #tpu.memory_space<vmem>>, vector<4x320xf32>
    %83 = tpu.concatenate %58, %59, %60, %61, %62, %63, %64, %65, %66, %67, %68, %69, %70, %71, %72, %73 in 0 : vector<4x320xf32>, vector<4x320xf32>, vector<4x320xf32>, vector<4x320xf32>, vector<4x320xf32>, vector<4x320xf32>, vector<4x320xf32>, vector<4x320xf32>, vector<4x320xf32>, vector<4x320xf32>, vector<4x320xf32>, vector<4x320xf32>, vector<4x320xf32>, vector<4x320xf32>, vector<4x320xf32>, vector<4x320xf32> -> vector<64x320xf32>
    %84 = tpu.concatenate %74, %75, %76, %77, %78, %79, %80, %81, %82 in 0 : vector<4x320xf32>, vector<4x320xf32>, vector<4x320xf32>, vector<4x320xf32>, vector<4x320xf32>, vector<4x320xf32>, vector<4x320xf32>, vector<4x320xf32>, vector<4x320xf32> -> vector<36x320xf32>
    %85 = tpu.concatenate %83, %84 in 0 : vector<64x320xf32>, vector<36x320xf32> -> vector<100x320xf32>
    %c0_96 = arith.constant 0 : index
    %c0_97 = arith.constant 0 : index
    %86 = vector.load %arg7[%c0_96, %c0_97] : memref<4x100xbf16, #tpu.memory_space<vmem>>, vector<4x100xbf16>
    %87 = arith.truncf %85 : vector<100x320xf32> to vector<100x320xbf16>
    %cst_98 = arith.constant dense<0.000000e+00> : vector<4x320xf32>
    %88 = tpu.matmul %86, %87, %cst_98 {dimension_numbers = #tpu.dot_dimension_numbers<[1], [0], [0], [1], [0, 0, 1, 1], [], []>} : vector<4x100xbf16>, vector<100x320xbf16>, vector<4x320xf32> -> vector<4x320xf32>
    %c0_99 = arith.constant 0 : index
    %c0_100 = arith.constant 0 : index
    %89 = vector.load %arg8[%c0_99, %c0_100] : memref<4x1xf32, #tpu.memory_space<vmem>>, vector<4x1xf32>
    %90 = vector.broadcast %89 : vector<4x1xf32> to vector<4x320xf32>
    %91 = arith.addf %88, %90 : vector<4x320xf32>
    %92 = vector.broadcast %0 : vector<1x320xf32> to vector<4x320xf32>
    %93 = arith.mulf %91, %92 : vector<4x320xf32>
    %cst_101 = arith.constant 0.000000e+00 : f32
    %94 = vector.broadcast %cst_101 : f32 to vector<4x42xf32>
    %c0_102 = arith.constant 0 : index
    %c0_103 = arith.constant 0 : index
    %c0_104 = arith.constant 0 : index
    %95 = vector.load %arg9[%c0_102, %c0_103, %c0_104] : memref<1x4x404xf32, #tpu.memory_space<vmem>>, vector<1x4x42xf32>
    %96 = vector.shape_cast %95 : vector<1x4x42xf32> to vector<4x42xf32>
    %97 = vector.shape_cast %94 : vector<4x42xf32> to vector<1x4x42xf32>
    tpu.vector_store %arg9[%c0_102, %c0_103, %c0_104], %97 {strides = array<i32>} : memref<1x4x404xf32, #tpu.memory_space<vmem>>, vector<1x4x42xf32>,
    %c0_105 = arith.constant 0 : index
    %c0_106 = arith.constant 0 : index
    %c42_107 = arith.constant 42 : index
    %98 = vector.load %arg9[%c0_105, %c0_106, %c42_107] : memref<1x4x404xf32, #tpu.memory_space<vmem>>, vector<1x4x320xf32>
    %99 = vector.shape_cast %98 : vector<1x4x320xf32> to vector<4x320xf32>
    %100 = vector.shape_cast %93 : vector<4x320xf32> to vector<1x4x320xf32>
    tpu.vector_store %arg9[%c0_105, %c0_106, %c42_107], %100 {strides = array<i32>} : memref<1x4x404xf32, #tpu.memory_space<vmem>>, vector<1x4x320xf32>,
    %c0_108 = arith.constant 0 : index
    %c0_109 = arith.constant 0 : index
    %c362_110 = arith.constant 362 : index
    %101 = vector.load %arg9[%c0_108, %c0_109, %c362_110] : memref<1x4x404xf32, #tpu.memory_space<vmem>>, vector<1x4x42xf32>
    %102 = vector.shape_cast %101 : vector<1x4x42xf32> to vector<4x42xf32>
    %103 = vector.shape_cast %94 : vector<4x42xf32> to vector<1x4x42xf32>
    tpu.vector_store %arg9[%c0_108, %c0_109, %c362_110], %103 {strides = array<i32>} : memref<1x4x404xf32, #tpu.memory_space<vmem>>, vector<1x4x42xf32>,
    return
  }
  func.func @transform_0(%arg0: i32) -> (i32, i32, i32) {
    %c0_i32 = arith.constant 0 : i32
    %c0_i32_0 = arith.constant 0 : i32
    %c0_i32_1 = arith.constant 0 : i32
    return %arg0, %c0_i32, %c0_i32_0 : i32, i32, i32
  }
  func.func @transform_1(%arg0: i32) -> (i32, i32) {
    %c0_i32 = arith.constant 0 : i32
    %c0_i32_0 = arith.constant 0 : i32
    %c0_i32_1 = arith.constant 0 : i32
    return %c0_i32, %c0_i32_0 : i32, i32
  }
  func.func @transform_2(%arg0: i32) -> (i32, i32) {
    %c0_i32 = arith.constant 0 : i32
    %c0_i32_0 = arith.constant 0 : i32
    %c0_i32_1 = arith.constant 0 : i32
    return %c0_i32, %c0_i32_0 : i32, i32
  }
  func.func @transform_3(%arg0: i32) -> (i32, i32) {
    %c0_i32 = arith.constant 0 : i32
    %c0_i32_0 = arith.constant 0 : i32
    %c0_i32_1 = arith.constant 0 : i32
    return %c0_i32, %c0_i32_0 : i32, i32
  }
  func.func @transform_4(%arg0: i32) -> (i32, i32) {
    %c0_i32 = arith.constant 0 : i32
    %c0_i32_0 = arith.constant 0 : i32
    %c0_i32_1 = arith.constant 0 : i32
    return %c0_i32, %c0_i32_0 : i32, i32
  }
  func.func @transform_5(%arg0: i32) -> (i32, i32) {
    %c0_i32 = arith.constant 0 : i32
    %c0_i32_0 = arith.constant 0 : i32
    %c0_i32_1 = arith.constant 0 : i32
    return %c0_i32, %c0_i32_0 : i32, i32
  }
  func.func @transform_6(%arg0: i32) -> (i32, i32) {
    %c0_i32 = arith.constant 0 : i32
    %c0_i32_0 = arith.constant 0 : i32
    %c0_i32_1 = arith.constant 0 : i32
    return %c0_i32, %c0_i32_0 : i32, i32
  }
  func.func @transform_7(%arg0: i32) -> (i32, i32) {
    %c0_i32 = arith.constant 0 : i32
    %c0_i32_0 = arith.constant 0 : i32
    %c0_i32_1 = arith.constant 0 : i32
    return %c0_i32, %c0_i32_0 : i32, i32
  }
  func.func @transform_8(%arg0: i32) -> (i32, i32, i32) {
    %c0_i32 = arith.constant 0 : i32
    %c0_i32_0 = arith.constant 0 : i32
    %c0_i32_1 = arith.constant 0 : i32
    return %arg0, %c0_i32, %c0_i32_0 : i32, i32, i32
  }
}

</mosaic_0001>

<llo_original>
// kernel: _run_chain.1
$region0: #{_run_chain.1}
  #allocation0 [shape = 'u32[]', space=smem, size = 0x4, offset = 0x4, fixed_abs, tag = 'smem constant byte address 0x4 - core index']
  #allocation1 [shape = 'u32[144,128]{1,0:T(1,128)}', space=vmem, size = 0x12000, scoped, tag = 'internal scratch']
  #allocation2 [shape = 'f32[4,404]{1,0:T(4,128)}', space=vmem, size = 0x2000, scoped, tag = 'scratch operand']
  #allocation3 [shape = 'f32[4,404]{1,0:T(4,128)}', space=vmem, size = 0x2000, scoped, tag = 'scratch operand']
  %s0 = inlined_call_operand.vmem [shape: f32[2,1,404], index: 0, kind: input, shape index: {}]
  %s1 = inlined_call_operand.vmem [shape: f32[1,320], index: 1, kind: input, shape index: {}]
  %s2 = inlined_call_operand.vmem [shape: bf16[4,9], index: 2, kind: input, shape index: {}]
  %s3 = inlined_call_operand.vmem [shape: f32[4,1], index: 3, kind: input, shape index: {}]
  %s4 = inlined_call_operand.vmem [shape: bf16[4,36], index: 4, kind: input, shape index: {}]
  %s5 = inlined_call_operand.vmem [shape: f32[4,1], index: 5, kind: input, shape index: {}]
  %s6 = inlined_call_operand.vmem [shape: bf16[4,100], index: 6, kind: input, shape index: {}]
  %s7 = inlined_call_operand.vmem [shape: f32[4,1], index: 7, kind: input, shape index: {}]
  %s8 = inlined_call_operand.hbm [shape: f32[2,4,404], index: 8, kind: output, shape index: {}]
  %s9 = sld [smem:[#allocation0]]
  $region65: #{_run_chain.1} parent=0
    _
  %s11 = ssub.s32 1, %s9
  %s12 = scalar_select 0, %s11, %s9
  $region1: #{_run_chain.1} parent=0
    #allocation4 [shape = 'u8[16384]{0}', space=vmem, size = 0x4000, scoped, tag = 'output window, operand 0']
    #allocation5 [shape = 's32[2]{0}', space=sflag, size = 0x8, scoped, tag = 'scoped memory for _run_chain.1']
    %13 = vsyncpa [#allocation5], 0
    %s14 = scalar_lea.sflag [#allocation5], 1
    %15 = vsyncpa %s14, 0
    loop: start=0, step=1, limit=4
    $region2: #{_run_chain.1} parent=1 // loop_pre_header
      _
    $region3: #{_run_chain.1} parent=1 // loop_header
      %s17 = sphi 0, %s21
      %p18 = scmp.ge.s32.totalorder %s17, 4
      %s27 = sphi 0, %s29
      %s30 = sphi 0, %s27
      %s31 = sphi 0, %s30
      %s47 = sphi 0, %s31
      %s51 = sphi 0, %s51
      %s53 = sphi 0, %s51
      %s54 = sphi 0, %s53
      %s68 = sphi 0, %s54
      %s72 = sphi 0, %s72
      %s74 = sphi 0, %s72
      %s75 = sphi 0, %s74
      %s89 = sphi 0, %s75
      %s93 = sphi 0, %s93
      %s95 = sphi 0, %s93
      %s96 = sphi 0, %s95
      %s110 = sphi 0, %s96
      %s114 = sphi 0, %s114
      %s116 = sphi 0, %s114
      %s117 = sphi 0, %s116
      %s131 = sphi 0, %s117
      %s135 = sphi 0, %s135
      %s137 = sphi 0, %s135
      %s138 = sphi 0, %s137
      %s152 = sphi 0, %s138
      %s156 = sphi 0, %s156
      %s158 = sphi 0, %s156
      %s159 = sphi 0, %s158
      %s173 = sphi 0, %s159
      %s177 = sphi 0, %s177
      %s179 = sphi 0, %s177
      %s180 = sphi 0, %s179
      %s194 = sphi 0, %s180
      %s200 = sphi 0, %s202
      %s203 = sphi 0, %s200
      %s204 = sphi 0, %s203
      %s220 = sphi 0, %s204
    $region4: #{_run_chain.1} parent=1 // loop_header_branch
      %20 = sbr.rel (%p18) target = $region8
    $region5: #{_run_chain.1} parent=1 // loop_body
      %s22 = ssub.s32 %s17, 1
      %s23 = ssub.s32 %s17, 2
      %s24 = sadd.s32 %s17, 1
      %s25 = ssub.s32 %s17, %s24
      %p26 = scmp.eq.s32.totalorder %s25, 0
      %s28 = sadd.s32 %s27, 1
      %s29 = scalar_select %p26, %s27, %s28
      %p32 = pneg %p26
      %p33 = scmp.eq.s32.totalorder %s17, 1
      %p34 = por %p32, %p33
      %p35 = scmp.ne.s32.totalorder %s27, %s30
      %p36 = scmp.eq.s32.totalorder %s17, 0
      %p37 = por %p35, %p36
      %p38 = scmp.ne.s32.totalorder %s27, %s30
      %p39 = scmp.eq.s32.totalorder %s22, 1
      %p40 = por %p38, %p39
      %p41 = scmp.ne.s32.totalorder %s30, %s31
      %p42 = scmp.eq.s32.totalorder %s22, 0
      %p43 = por %p41, %p42
      %p44 = scmp.ne.s32.totalorder %s30, %s31
      %p45 = scmp.eq.s32.totalorder %s23, 1
      %p46 = por %p44, %p45
      %p48 = scmp.ne.s32.totalorder %s31, %s47
      %p49 = scmp.eq.s32.totalorder %s23, 0
      %p50 = por %p48, %p49
      %s52 = sadd.s32 %s51, 1
      %p55 = scmp.eq.s32.totalorder %s17, 1
      %p56 = scmp.ne.s32.totalorder %s51, %s53
      %p57 = scmp.eq.s32.totalorder %s17, 0
      %p58 = por %p56, %p57
      %p59 = scmp.ne.s32.totalorder %s51, %s53
      %p60 = scmp.eq.s32.totalorder %s22, 1
      %p61 = por %p59, %p60
      %p62 = scmp.ne.s32.totalorder %s53, %s54
      %p63 = scmp.eq.s32.totalorder %s22, 0
      %p64 = por %p62, %p63
      %p65 = scmp.ne.s32.totalorder %s53, %s54
      %p66 = scmp.eq.s32.totalorder %s23, 1
      %p67 = por %p65, %p66
      %p69 = scmp.ne.s32.totalorder %s54, %s68
      %p70 = scmp.eq.s32.totalorder %s23, 0
      %p71 = por %p69, %p70
      %s73 = sadd.s32 %s72, 1
      %p76 = scmp.eq.s32.totalorder %s17, 1
      %p77 = scmp.ne.s32.totalorder %s72, %s74
      %p78 = scmp.eq.s32.totalorder %s17, 0
      %p79 = por %p77, %p78
      %p80 = scmp.ne.s32.totalorder %s72, %s74
      %p81 = scmp.eq.s32.totalorder %s22, 1
      %p82 = por %p80, %p81
      %p83 = scmp.ne.s32.totalorder %s74, %s75
      %p84 = scmp.eq.s32.totalorder %s22, 0
      %p85 = por %p83, %p84
      %p86 = scmp.ne.s32.totalorder %s74, %s75
      %p87 = scmp.eq.s32.totalorder %s23, 1
      %p88 = por %p86, %p87
      %p90 = scmp.ne.s32.totalorder %s75, %s89
      %p91 = scmp.eq.s32.totalorder %s23, 0
      %p92 = por %p90, %p91
      %s94 = sadd.s32 %s93, 1
      %p97 = scmp.eq.s32.totalorder %s17, 1
      %p98 = scmp.ne.s32.totalorder %s93, %s95
      %p99 = scmp.eq.s32.totalorder %s17, 0
      %p100 = por %p98, %p99
      %p101 = scmp.ne.s32.totalorder %s93, %s95
      %p102 = scmp.eq.s32.totalorder %s22, 1
      %p103 = por %p101, %p102
      %p104 = scmp.ne.s32.totalorder %s95, %s96
      %p105 = scmp.eq.s32.totalorder %s22, 0
      %p106 = por %p104, %p105
      %p107 = scmp.ne.s32.totalorder %s95, %s96
      %p108 = scmp.eq.s32.totalorder %s23, 1
      %p109 = por %p107, %p108
      %p111 = scmp.ne.s32.totalorder %s96, %s110
      %p112 = scmp.eq.s32.totalorder %s23, 0
      %p113 = por %p111, %p112
      %s115 = sadd.s32 %s114, 1
      %p118 = scmp.eq.s32.totalorder %s17, 1
      %p119 = scmp.ne.s32.totalorder %s114, %s116
      %p120 = scmp.eq.s32.totalorder %s17, 0
      %p121 = por %p119, %p120
      %p122 = scmp.ne.s32.totalorder %s114, %s116
      %p123 = scmp.eq.s32.totalorder %s22, 1
      %p124 = por %p122, %p123
      %p125 = scmp.ne.s32.totalorder %s116, %s117
      %p126 = scmp.eq.s32.totalorder %s22, 0
      %p127 = por %p125, %p126
      %p128 = scmp.ne.s32.totalorder %s116, %s117
      %p129 = scmp.eq.s32.totalorder %s23, 1
      %p130 = por %p128, %p129
      %p132 = scmp.ne.s32.totalorder %s117, %s131
      %p133 = scmp.eq.s32.totalorder %s23, 0
      %p134 = por %p132, %p133
      %s136 = sadd.s32 %s135, 1
      %p139 = scmp.eq.s32.totalorder %s17, 1
      %p140 = scmp.ne.s32.totalorder %s135, %s137
      %p141 = scmp.eq.s32.totalorder %s17, 0
      %p142 = por %p140, %p141
      %p143 = scmp.ne.s32.totalorder %s135, %s137
      %p144 = scmp.eq.s32.totalorder %s22, 1
      %p145 = por %p143, %p144
      %p146 = scmp.ne.s32.totalorder %s137, %s138
      %p147 = scmp.eq.s32.totalorder %s22, 0
      %p148 = por %p146, %p147
      %p149 = scmp.ne.s32.totalorder %s137, %s138
      %p150 = scmp.eq.s32.totalorder %s23, 1
      %p151 = por %p149, %p150
      %p153 = scmp.ne.s32.totalorder %s138, %s152
      %p154 = scmp.eq.s32.totalorder %s23, 0
      %p155 = por %p153, %p154
      %s157 = sadd.s32 %s156, 1
      %p160 = scmp.eq.s32.totalorder %s17, 1
      %p161 = scmp.ne.s32.totalorder %s156, %s158
      %p162 = scmp.eq.s32.totalorder %s17, 0
      %p163 = por %p161, %p162
      %p164 = scmp.ne.s32.totalorder %s156, %s158
      %p165 = scmp.eq.s32.totalorder %s22, 1
      %p166 = por %p164, %p165
      %p167 = scmp.ne.s32.totalorder %s158, %s159
      %p168 = scmp.eq.s32.totalorder %s22, 0
      %p169 = por %p167, %p168
      %p170 = scmp.ne.s32.totalorder %s158, %s159
      %p171 = scmp.eq.s32.totalorder %s23, 1
      %p172 = por %p170, %p171
      %p174 = scmp.ne.s32.totalorder %s159, %s173
      %p175 = scmp.eq.s32.totalorder %s23, 0
      %p176 = por %p174, %p175
      %s178 = sadd.s32 %s177, 1
      %p181 = scmp.eq.s32.totalorder %s17, 1
      %p182 = scmp.ne.s32.totalorder %s177, %s179
      %p183 = scmp.eq.s32.totalorder %s17, 0
      %p184 = por %p182, %p183
      %p185 = scmp.ne.s32.totalorder %s177, %s179
      %p186 = scmp.eq.s32.totalorder %s22, 1
      %p187 = por %p185, %p186
      %p188 = scmp.ne.s32.totalorder %s179, %s180
      %p189 = scmp.eq.s32.totalorder %s22, 0
      %p190 = por %p188, %p189
      %p191 = scmp.ne.s32.totalorder %s179, %s180
      %p192 = scmp.eq.s32.totalorder %s23, 1
      %p193 = por %p191, %p192
      %p195 = scmp.ne.s32.totalorder %s180, %s194
      %p196 = scmp.eq.s32.totalorder %s23, 0
      %p197 = por %p195, %p196
      %s198 = ssub.s32 %s17, %s24
      %p199 = scmp.eq.s32.totalorder %s198, 0
      %s201 = sadd.s32 %s200, 1
      %s202 = scalar_select %p199, %s200, %s201
      %p205 = pneg %p199
      %p206 = scmp.eq.s32.totalorder %s17, 1
      %p207 = por %p205, %p206
      %p208 = scmp.ne.s32.totalorder %s200, %s203
      %p209 = scmp.eq.s32.totalorder %s17, 0
      %p210 = por %p208, %p209
      %p211 = scmp.ne.s32.totalorder %s200, %s203
      %p212 = scmp.eq.s32.totalorder %s22, 1
      %p213 = por %p211, %p212
      %p214 = scmp.ne.s32.totalorder %s203, %s204
      %p215 = scmp.eq.s32.totalorder %s22, 0
      %p216 = por %p214, %p215
      %p217 = scmp.ne.s32.totalorder %s203, %s204
      %p218 = scmp.eq.s32.totalorder %s23, 1
      %p219 = por %p217, %p218
      %p221 = scmp.ne.s32.totalorder %s204, %s220
      %p222 = scmp.eq.s32.totalorder %s23, 0
      %p223 = por %p221, %p222
      %p224 = scmp.le.s32.totalorder 1, %s17
      %p225 = scmp.lt.s32.totalorder %s17, 3
      %p226 = pnand %p224, %p225
      %p227 = pneg %p226
      // Predicated region
      $region9: #{_run_chain.1} parent=5 // pred_check
        _
      $region10: #{_run_chain.1} parent=5 // pred_check_branch
        %229 = sbr.rel (%p226) target = $region12
      $region11: #{_run_chain.1} parent=5 // pred_region
        %s230 = ssub.s32 %s17, 1
        // Predicated region
        $region13: #{_run_chain.1} parent=11 // pred_check
          %p231 = pneg %p64
        $region14: #{_run_chain.1} parent=11 // pred_check_branch
          %233 = sbr.rel (%p231) target = $region16
        $region15: #{_run_chain.1} parent=11 // pred_region
          _
        $region16: #{_run_chain.1} parent=11 // pred_fallthru
          _
        // Predicated region
        $region17: #{_run_chain.1} parent=11 // pred_check
          %p234 = pneg %p85
        $region18: #{_run_chain.1} parent=11 // pred_check_branch
          %236 = sbr.rel (%p234) target = $region20
        $region19: #{_run_chain.1} parent=11 // pred_region
          _
        $region20: #{_run_chain.1} parent=11 // pred_fallthru
          _
        // Predicated region
        $region21: #{_run_chain.1} parent=11 // pred_check
          %p237 = pneg %p106
        $region22: #{_run_chain.1} parent=11 // pred_check_branch
          %239 = sbr.rel (%p237) target = $region24
        $region23: #{_run_chain.1} parent=11 // pred_region
          _
        $region24: #{_run_chain.1} parent=11 // pred_fallthru
          _
        // Predicated region
        $region25: #{_run_chain.1} parent=11 // pred_check
          %p240 = pneg %p127
        $region26: #{_run_chain.1} parent=11 // pred_check_branch
          %242 = sbr.rel (%p240) target = $region28
        $region27: #{_run_chain.1} parent=11 // pred_region
          _
        $region28: #{_run_chain.1} parent=11 // pred_fallthru
          _
        // Predicated region
        $region29: #{_run_chain.1} parent=11 // pred_check
          %p243 = pneg %p148
        $region30: #{_run_chain.1} parent=11 // pred_check_branch
          %245 = sbr.rel (%p243) target = $region32
        $region31: #{_run_chain.1} parent=11 // pred_region
          _
        $region32: #{_run_chain.1} parent=11 // pred_fallthru
          _
        // Predicated region
        $region33: #{_run_chain.1} parent=11 // pred_check
          %p246 = pneg %p169
        $region34: #{_run_chain.1} parent=11 // pred_check_branch
          %248 = sbr.rel (%p246) target = $region36
        $region35: #{_run_chain.1} parent=11 // pred_region
          _
        $region36: #{_run_chain.1} parent=11 // pred_fallthru
          _
        // Predicated region
        $region37: #{_run_chain.1} parent=11 // pred_check
          %p249 = pneg %p190
        $region38: #{_run_chain.1} parent=11 // pred_check_branch
          %251 = sbr.rel (%p249) target = $region40
        $region39: #{_run_chain.1} parent=11 // pred_region
          _
        $region40: #{_run_chain.1} parent=11 // pred_fallthru
          _
      $region12: #{_run_chain.1} parent=5 // pred_fallthru
        _
      %p252 = scmp.lt.s32.totalorder %s17, 2
      // Predicated region
      $region41: #{_run_chain.1} parent=5 // pred_check
        %p253 = pneg %p252
      $region42: #{_run_chain.1} parent=5 // pred_check_branch
        %255 = sbr.rel (%p253) target = $region44
      $region43: #{_run_chain.1} parent=5 // pred_region
        // Predicated region
        $region45: #{_run_chain.1} parent=43 // pred_check
          %p256 = pneg %p37
        $region46: #{_run_chain.1} parent=43 // pred_check_branch
          %258 = sbr.rel (%p256) target = $region48
        $region47: #{_run_chain.1} parent=43 // pred_region
          %p259 = scmp.lt.s32.totalorder %s17, 1
          %s260 = scalar_select %p259, %s17, 1
          %s261 = smul.addr %s260, 4
          %s262 = scalar_lea.vmem %s0, %s261
        $region48: #{_run_chain.1} parent=43 // pred_fallthru
          _
      $region44: #{_run_chain.1} parent=5 // pred_fallthru
        _
      %p263 = scmp.le.s32.totalorder 1, %s17
      %p264 = scmp.lt.s32.totalorder %s17, 3
      %p265 = pnand %p263, %p264
      %p266 = pneg %p265
      // Predicated region
      $region49: #{_run_chain.1} parent=5 // pred_check
        _
      $region50: #{_run_chain.1} parent=5 // pred_check_branch
        %268 = sbr.rel (%p265) target = $region52
      $region51: #{_run_chain.1} parent=5 // pred_region
        %s269 = ssub.s32 %s17, 1
        %p270 = scmp.lt.s32.totalorder %s22, 1
        %s271 = scalar_select %p270, %s22, 1
        %s272 = smul.addr %s271, 4
        %s273 = scalar_lea.vmem %s0, %s272
        %p274 = pneg %p43
        %p275 = pneg %p40
        %p276 = pneg %p64
        %p277 = pneg %p61
        %p278 = pneg %p85
        %p279 = pneg %p82
        %p280 = pneg %p106
        %p281 = pneg %p103
        %p282 = pneg %p127
        %p283 = pneg %p124
        %p284 = pneg %p148
        %p285 = pneg %p145
        %p286 = pneg %p169
        %p287 = pneg %p166
        %p288 = pneg %p190
        %p289 = pneg %p187
        %p290 = pneg %p216
        %p291 = pneg %p213
        %s292 = sand.u32 %s203, 1
        %s293 = scalar_lea.sflag [#allocation5], %s292
        %s294 = sand.u32 %s203, 1
        %s295 = smul.addr %s294, 16
        %s296 = scalar_lea.vmem [#allocation4], %s295
        %p297 = scmp.lt.s32.totalorder %s22, 1
        %s298 = scalar_select %p297, %s22, 1
        %s299 = smul.addr %s298, 4
        %s300 = scalar_lea.vmem %s0, %s299
        %v302 = vld [vmem:[%s1] sm:$0x7]
        %vm303 = vcmask 338944
        %304 = vst.msk [vmem:[#allocation2] sm:$0xf] %vm303, 0.0
        %vm305 = vcmask 1044304
        %vm306 = vcmask 162820
        %vm307 = vmor %vm306, %vm305
        %308 = vst.msk [vmem:[#allocation2 + $0x8] sm:$0xff] %vm307, 0.0
        %309 = vst.msk [vmem:[#allocation3] sm:$0xf] %vm303, 0.0
        %310 = vst.msk [vmem:[#allocation3 + $0x8] sm:$0xff] %vm307, 0.0
        %v311 = vld [vmem:[%s300] sm:$0x7]
        %v313 = vlaneseq
        %v314 = vshrl.u32 %v313, 7
        %v315 = vsub.s32 0, %v314
        %v316 = vrot.slane %v311, %v315
        %v317 = vlaneseq
        %v318 = vshrl.u32 %v317, 7
        %v319 = vsub.s32 1, %v318
        %v320 = vrot.slane %v311, %v319
        %v321 = vlaneseq
        %v322 = vshrl.u32 %v321, 7
        %v323 = vsub.s32 2, %v322
        %v324 = vrot.slane %v311, %v323
        %328 = vrot.lane.b32.xlu0 %v316, 127
        %v329 = vpop.permute.xlu0 %328
        %330 = vrot.lane.b32.xlu0 %v320, 127
        %v331 = vpop.permute.xlu0 %330
        %332 = vrot.lane.b32.xlu0 %v324, 127
        %v333 = vpop.permute.xlu0 %332
        %vm334 = vcmask 1039360
        %v335 = vsel %vm334, %v329, %v331
        %v336 = vsel %vm334, %v331, %v333
        %340 = vrot.lane.b32.xlu0 %v316, 126
        %v341 = vpop.permute.xlu0 %340
        %342 = vrot.lane.b32.xlu0 %v320, 126
        %v343 = vpop.permute.xlu0 %342
        %344 = vrot.lane.b32.xlu0 %v324, 126
        %v345 = vpop.permute.xlu0 %344
        %vm346 = vcmask 1031168
        %v347 = vsel %vm346, %v341, %v343
        %v348 = vsel %vm346, %v343, %v345
        %352 = vrot.lane.b32.xlu0 %v316, 108
        %v353 = vpop.permute.xlu0 %352
        %354 = vrot.lane.b32.xlu0 %v320, 108
        %v355 = vpop.permute.xlu0 %354
        %356 = vrot.lane.b32.xlu0 %v324, 108
        %v357 = vpop.permute.xlu0 %356
        %vm358 = vcmask 883712
        %v359 = vsel %vm358, %v353, %v355
        %v360 = vsel %vm358, %v355, %v357
        %364 = vrot.lane.b32.xlu0 %v316, 107
        %v365 = vpop.permute.xlu0 %364
        %366 = vrot.lane.b32.xlu0 %v320, 107
        %v367 = vpop.permute.xlu0 %366
        %368 = vrot.lane.b32.xlu0 %v324, 107
        %v369 = vpop.permute.xlu0 %368
        %vm370 = vcmask 875520
        %v371 = vsel %vm370, %v365, %v367
        %v372 = vsel %vm370, %v367, %v369
        %376 = vrot.lane.b32.xlu0 %v316, 106
        %v377 = vpop.permute.xlu0 %376
        %378 = vrot.lane.b32.xlu0 %v320, 106
        %v379 = vpop.permute.xlu0 %378
        %380 = vrot.lane.b32.xlu0 %v324, 106
        %v381 = vpop.permute.xlu0 %380
        %vm382 = vcmask 867328
        %v383 = vsel %vm382, %v377, %v379
        %v384 = vsel %vm382, %v379, %v381
        %388 = vrot.lane.b32.xlu0 %v316, 88
        %v389 = vpop.permute.xlu0 %388
        %390 = vrot.lane.b32.xlu0 %v320, 88
        %v391 = vpop.permute.xlu0 %390
        %392 = vrot.lane.b32.xlu0 %v324, 88
        %v393 = vpop.permute.xlu0 %392
        %vm394 = vcmask 719872
        %v395 = vsel %vm394, %v389, %v391
        %v396 = vsel %vm394, %v391, %v393
        %400 = vrot.lane.b32.xlu0 %v316, 87
        %v401 = vpop.permute.xlu0 %400
        %402 = vrot.lane.b32.xlu0 %v320, 87
        %v403 = vpop.permute.xlu0 %402
        %404 = vrot.lane.b32.xlu0 %v324, 87
        %v405 = vpop.permute.xlu0 %404
        %vm406 = vcmask 711680
        %v407 = vsel %vm406, %v401, %v403
        %v408 = vsel %vm406, %v403, %v405
        %412 = vrot.lane.b32.xlu0 %v316, 86
        %v413 = vpop.permute.xlu0 %412
        %414 = vrot.lane.b32.xlu0 %v320, 86
        %v415 = vpop.permute.xlu0 %414
        %416 = vrot.lane.b32.xlu0 %v324, 86
        %v417 = vpop.permute.xlu0 %416
        %vm418 = vcmask 703488
        %v419 = vsel %vm418, %v413, %v415
        %v420 = vsel %vm418, %v415, %v417
        %vm424 = vcmask 1040384
        %v425 = vsel %vm424, %v316, %v335
        %v426 = vsel %vm424, %v320, %v336
        %v427 = vsel %vm424, %v324, %v333
        %vm428 = vcmask 1041408
        %v429 = vsel %vm428, %v425, %v347
        %v430 = vsel %vm428, %v426, %v348
        %v431 = vsel %vm428, %v427, %v345
        %vm432 = vcmask 1042432
        %v433 = vsel %vm432, %v429, %v359
        %v434 = vsel %vm432, %v430, %v360
        %v435 = vsel %vm432, %v431, %v357
        %vm436 = vcmask 1043456
        %v437 = vsel %vm436, %v433, %v371
        %v438 = vsel %vm436, %v434, %v372
        %v439 = vsel %vm436, %v435, %v369
        %vm440 = vcmask 1044480
        %v441 = vsel %vm440, %v437, %v383
        %v442 = vsel %vm440, %v438, %v384
        %v443 = vsel %vm440, %v439, %v381
        %vm444 = vcmask 1045504
        %v445 = vsel %vm444, %v441, %v395
        %v446 = vsel %vm444, %v442, %v396
        %v447 = vsel %vm444, %v443, %v393
        %vm448 = vcmask 1046528
        %v449 = vsel %vm448, %v445, %v407
        %v450 = vsel %vm448, %v446, %v408
        %v451 = vsel %vm448, %v447, %v405
        %v452 = vld [vmem:[%s2] sm:$0x3]
        %v453 = vpack.c.bf16 %v419, %v449
        %v454 = vpack.c.bf16 %v420, %v450
        %v455 = vpack.c.bf16 %v417, %v451
        %v456 = vld [vmem:[%s3] sm:$0xf]
        %458 = vset.pattern.permute.xlu0 0
        %459 = vperm.xlu0 %458, %v456
        %v460 = vpop.permute.xlu0 %459
        %465 = vrot.lane.b32.xlu0 %v453, 107
        %v466 = vpop.permute.xlu0 %465
        %467 = vrot.lane.b32.xlu0 %v454, 107
        %v468 = vpop.permute.xlu0 %467
        %469 = vrot.lane.b32.xlu0 %v455, 107
        %v470 = vpop.permute.xlu0 %469
        %vm471 = vcmask 875520
        %v472 = vsel %vm471, %v466, %v468
        %v473 = vsel %vm471, %v468, %v470
        %vm474 = vcmask 72704
        %v476 = vsel %vm474, %v452, 0
        %v478 = vsel %vm436, 4294967295, 65535
        %v479 = vsel %vm440, %v478, 0
        %v481 = vand.u32 %v472, %v479
        %v484 = vand.u32 %v473, %v479
        %v487 = vand.u32 %v470, %v479
        %489 = vmatprep.subr.bf16.mxu0 %v484
        %490 = vmatpush1.bf16.msra.mxu0 %v481
        %491 = vmatprep.subr.bf16.mxu0 0
        %492 = vmatpush1.bf16.msra.mxu0 0
        %493 = vmatprep.subr.bf16.mxu0 0
        %494 = vmatpush1.bf16.msra.mxu0 0
        %495 = vmatprep.subr.bf16.mxu0 0
        %496 = vmatpush1.bf16.msra.mxu0 0
        %497 = vmatprep.subr.bf16.mxu0 0
        %498 = vmatpush1.bf16.msra.mxu0 0
        %499 = vmatprep.subr.bf16.mxu0 0
        %500 = vmatpush1.bf16.msra.mxu0 0
        %501 = vmatprep.subr.bf16.mxu0 0
        %502 = vmatpush1.bf16.msra.mxu0 0
        %503 = vmatprep.subr.bf16.mxu0 0
        %504 = vmatpush1.bf16.msra.mxu0 0
        %505 = vmatprep.subr.bf16.mxu0 0
        %506 = vmatpush1.bf16.msra.mxu0 0
        %507 = vmatprep.subr.bf16.mxu0 0
        %508 = vmatpush1.bf16.msra.mxu0 0
        %509 = vmatprep.subr.bf16.mxu0 0
        %510 = vmatpush1.bf16.msra.mxu0 0
        %511 = vmatprep.subr.bf16.mxu0 0
        %512 = vmatpush1.bf16.msra.mxu0 0
        %513 = vmatprep.subr.bf16.mxu0 0
        %514 = vmatpush1.bf16.msra.mxu0 0
        %515 = vmatprep.subr.bf16.mxu0 0
        %516 = vmatpush1.bf16.msra.mxu0 0
        %517 = vmatprep.subr.bf16.mxu0 0
        %518 = vmatpush1.bf16.msra.mxu0 0
        %519 = vmatprep.subr.bf16.mxu0 0
        %520 = vmatpush1.bf16.msra.mxu0 0
        %521 = vmatprep.mubr.bf16.mxu0 0
        %522 = vmatmul.mubr.bf16.gmra.mrb[0].mxu0 %v476
        %v523 = vpop.f32.mrb[0].mxu0
        %v524 = vadd.f32 %v460, %v523
        %v525 = vpop.f32.mrb[0].mxu0
        %v526 = vadd.f32 %v460, %v525
        %v527 = vpop.f32.mrb[0].mxu0
        %v528 = vpop.f32.mrb[0].mxu0
        %529 = vdwg.mxu0
        %530 = vmatprep.subr.bf16.mxu0 0
        %531 = vmatpush1.bf16.msra.mxu0 %v487
        %532 = vmatprep.subr.bf16.mxu0 0
        %533 = vmatpush1.bf16.msra.mxu0 0
        %534 = vmatprep.subr.bf16.mxu0 0
        %535 = vmatpush1.bf16.msra.mxu0 0
        %536 = vmatprep.subr.bf16.mxu0 0
        %537 = vmatpush1.bf16.msra.mxu0 0
        %538 = vmatprep.subr.bf16.mxu0 0
        %539 = vmatpush1.bf16.msra.mxu0 0
        %540 = vmatprep.subr.bf16.mxu0 0
        %541 = vmatpush1.bf16.msra.mxu0 0
        %542 = vmatprep.subr.bf16.mxu0 0
        %543 = vmatpush1.bf16.msra.mxu0 0
        %544 = vmatprep.subr.bf16.mxu0 0
        %545 = vmatpush1.bf16.msra.mxu0 0
        %546 = vmatprep.subr.bf16.mxu0 0
        %547 = vmatpush1.bf16.msra.mxu0 0
        %548 = vmatprep.subr.bf16.mxu0 0
        %549 = vmatpush1.bf16.msra.mxu0 0
        %550 = vmatprep.subr.bf16.mxu0 0
        %551 = vmatpush1.bf16.msra.mxu0 0
        %552 = vmatprep.subr.bf16.mxu0 0
        %553 = vmatpush1.bf16.msra.mxu0 0
        %554 = vmatprep.subr.bf16.mxu0 0
        %555 = vmatpush1.bf16.msra.mxu0 0
        %556 = vmatprep.subr.bf16.mxu0 0
        %557 = vmatpush1.bf16.msra.mxu0 0
        %558 = vmatprep.subr.bf16.mxu0 0
        %559 = vmatpush1.bf16.msra.mxu0 0
        %560 = vmatprep.subr.bf16.mxu0 0
        %561 = vmatpush1.bf16.msra.mxu0 0
        %562 = vmatprep.mubr.bf16.mxu0 0
        %563 = vmatmul.mubr.bf16.gmra.mrb[0].mxu0 %v476
        %v564 = vpop.f32.mrb[0].mxu0
        %v565 = vadd.f32 %v460, %v564
        %v566 = vpop.f32.mrb[0].mxu0
        %v567 = vpop.f32.mrb[0].mxu0
        %v568 = vpop.f32.mrb[0].mxu0
        %569 = vdwg.mxu0
        %v570 = vmax.f32 %v524, 0.0
        %v571 = vmax.f32 %v526, 0.0
        %v572 = vmax.f32 %v565, 0.0
        %v574 = vlaneseq
        %v575 = vshrl.u32 %v574, 7
        %v576 = vsub.s32 0, %v575
        %v577 = vrot.slane %v302, %v576
        %v578 = vlaneseq
        %v579 = vshrl.u32 %v578, 7
        %v580 = vsub.s32 1, %v579
        %v581 = vrot.slane %v302, %v580
        %v582 = vlaneseq
        %v583 = vshrl.u32 %v582, 7
        %v584 = vsub.s32 2, %v583
        %v585 = vrot.slane %v302, %v584
        %v589 = vmul.f32 %v570, %v577
        %v590 = vmul.f32 %v571, %v581
        %v591 = vmul.f32 %v572, %v585
        %v595 = vcombine.low %v589, %v590
        %596 = vrot.lane.b32.xlu0 %v595, 42
        %v597 = vpop.permute.xlu0 %596
        %598 = vrot.lane.b32.xlu0 %v591, 42
        %v599 = vpop.permute.xlu0 %598
        %v600 = vrot.slane %v597, 4
        %vm601 = vcmask 343040
        %v602 = vsel %vm601, %v600, %v597
        %v603 = vsel %vm601, %v600, %v599
        %vm606 = vcmask 1043792
        %vm607 = vcmask 1047556
        %vm608 = vmor %vm607, %vm606
        %609 = vst.msk [vmem:[#allocation2] sm:$0xff] %vm608, %v602
        %vm610 = vcmask 863232
        %611 = vst.msk [vmem:[#allocation2 + $0x8] sm:$0xf] %vm610, %v603
        %v612 = vld [vmem:[#allocation2] sm:$0xff]
        %v613 = vld [vmem:[#allocation2 + $0x8] sm:$0xf]
        %v616 = vcombine.high %v612, %v612
        %v618 = vcombine.low %v612, %v612
        %v619 = vcombine.low %v613, %v613
        %620 = vrot.lane.b32.xlu0 %v618, 127
        %v621 = vpop.permute.xlu0 %620
        %622 = vrot.lane.b32.xlu0 %v612, 127
        %v623 = vpop.permute.xlu0 %622
        %624 = vrot.lane.b32.xlu0 %v619, 127
        %v625 = vpop.permute.xlu0 %624
        %v626 = vsel %vm334, %v621, %v623
        %v627 = vsel %vm334, %v623, %v625
        %631 = vrot.lane.b32.xlu0 %v612, 126
        %v632 = vpop.permute.xlu0 %631
        %633 = vrot.lane.b32.xlu0 %v616, 126
        %v634 = vpop.permute.xlu0 %633
        %635 = vrot.lane.b32.xlu0 %v613, 126
        %v636 = vpop.permute.xlu0 %635
        %v637 = vsel %vm346, %v632, %v634
        %v638 = vsel %vm346, %v634, %v636
        %642 = vrot.lane.b32.xlu0 %v618, 108
        %v643 = vpop.permute.xlu0 %642
        %644 = vrot.lane.b32.xlu0 %v612, 108
        %v645 = vpop.permute.xlu0 %644
        %646 = vrot.lane.b32.xlu0 %v619, 108
        %v647 = vpop.permute.xlu0 %646
        %v648 = vsel %vm358, %v643, %v645
        %v649 = vsel %vm358, %v645, %v647
        %653 = vrot.lane.b32.xlu0 %v612, 107
        %v654 = vpop.permute.xlu0 %653
        %655 = vrot.lane.b32.xlu0 %v616, 107
        %v656 = vpop.permute.xlu0 %655
        %657 = vrot.lane.b32.xlu0 %v613, 107
        %v658 = vpop.permute.xlu0 %657
        %v659 = vsel %vm370, %v654, %v656
        %v660 = vsel %vm370, %v656, %v658
        %664 = vrot.lane.b32.xlu0 %v618, 106
        %v665 = vpop.permute.xlu0 %664
        %666 = vrot.lane.b32.xlu0 %v612, 106
        %v667 = vpop.permute.xlu0 %666
        %668 = vrot.lane.b32.xlu0 %v619, 106
        %v669 = vpop.permute.xlu0 %668
        %v670 = vsel %vm382, %v665, %v667
        %v671 = vsel %vm382, %v667, %v669
        %675 = vrot.lane.b32.xlu0 %v612, 88
        %v676 = vpop.permute.xlu0 %675
        %677 = vrot.lane.b32.xlu0 %v616, 88
        %v678 = vpop.permute.xlu0 %677
        %679 = vrot.lane.b32.xlu0 %v613, 88
        %v680 = vpop.permute.xlu0 %679
        %v681 = vsel %vm394, %v676, %v678
        %v682 = vsel %vm394, %v678, %v680
        %686 = vrot.lane.b32.xlu0 %v618, 87
        %v687 = vpop.permute.xlu0 %686
        %688 = vrot.lane.b32.xlu0 %v612, 87
        %v689 = vpop.permute.xlu0 %688
        %690 = vrot.lane.b32.xlu0 %v619, 87
        %v691 = vpop.permute.xlu0 %690
        %v692 = vsel %vm406, %v687, %v689
        %v693 = vsel %vm406, %v689, %v691
        %697 = vrot.lane.b32.xlu0 %v612, 86
        %v698 = vpop.permute.xlu0 %697
        %699 = vrot.lane.b32.xlu0 %v616, 86
        %v700 = vpop.permute.xlu0 %699
        %701 = vrot.lane.b32.xlu0 %v613, 86
        %v702 = vpop.permute.xlu0 %701
        %v703 = vsel %vm418, %v698, %v700
        %v704 = vsel %vm418, %v700, %v702
        %v708 = vsel %vm436, %v612, %v626
        %v709 = vsel %vm436, %v616, %v627
        %v710 = vsel %vm436, %v613, %v625
        %v711 = vsel %vm436, %v637, %v648
        %v712 = vsel %vm436, %v638, %v649
        %v713 = vsel %vm436, %v636, %v647
        %v714 = vsel %vm436, %v659, %v670
        %v715 = vsel %vm436, %v660, %v671
        %v716 = vsel %vm436, %v658, %v669
        %v717 = vsel %vm436, %v681, %v692
        %v718 = vsel %vm436, %v682, %v693
        %v719 = vsel %vm436, %v680, %v691
        %v720 = vld [vmem:[%s4] sm:$0x3]
        %v721 = vpack.c.bf16 %v711, %v708
        %v722 = vpack.c.bf16 %v712, %v709
        %v723 = vpack.c.bf16 %v713, %v710
        %v724 = vpack.c.bf16 %v717, %v714
        %v725 = vpack.c.bf16 %v718, %v715
        %v726 = vpack.c.bf16 %v719, %v716
        %v727 = vpack.c.bf16 %v703, %v703
        %v728 = vpack.c.bf16 %v704, %v704
        %v729 = vpack.c.bf16 %v702, %v702
        %v730 = vld [vmem:[%s5] sm:$0xf]
        %732 = vset.pattern.permute.xlu0 0
        %733 = vperm.xlu0 %732, %v730
        %v734 = vpop.permute.xlu0 %733
        %745 = vrot.lane.b32.xlu0 %v721, 107
        %v746 = vpop.permute.xlu0 %745
        %747 = vrot.lane.b32.xlu0 %v722, 107
        %v748 = vpop.permute.xlu0 %747
        %749 = vrot.lane.b32.xlu0 %v723, 107
        %v750 = vpop.permute.xlu0 %749
        %751 = vrot.lane.b32.xlu0 %v724, 107
        %v752 = vpop.permute.xlu0 %751
        %753 = vrot.lane.b32.xlu0 %v725, 107
        %v754 = vpop.permute.xlu0 %753
        %755 = vrot.lane.b32.xlu0 %v726, 107
        %v756 = vpop.permute.xlu0 %755
        %757 = vrot.lane.b32.xlu0 %v727, 107
        %v758 = vpop.permute.xlu0 %757
        %759 = vrot.lane.b32.xlu0 %v728, 107
        %v760 = vpop.permute.xlu0 %759
        %761 = vrot.lane.b32.xlu0 %v729, 107
        %v762 = vpop.permute.xlu0 %761
        %v763 = vsel %vm471, %v746, %v748
        %v764 = vsel %vm471, %v748, %v750
        %v765 = vsel %vm471, %v752, %v754
        %v766 = vsel %vm471, %v754, %v756
        %v767 = vsel %vm471, %v758, %v760
        %v768 = vsel %vm471, %v760, %v762
        %vm775 = vcmask 293888
        %v777 = vsel %vm775, %v720, 0
        %v780 = vsel %vm428, %v767, 0
        %v783 = vsel %vm428, %v768, 0
        %v786 = vsel %vm428, %v762, 0
        %788 = vmatprep.subr.bf16.mxu0 %v764
        %789 = vmatpush1.bf16.msra.mxu0 %v763
        %790 = vmatprep.subr.bf16.mxu0 %v766
        %791 = vmatpush1.bf16.msra.mxu0 %v765
        %792 = vmatprep.subr.bf16.mxu0 %v783
        %793 = vmatpush1.bf16.msra.mxu0 %v780
        %794 = vmatprep.subr.bf16.mxu0 0
        %795 = vmatpush1.bf16.msra.mxu0 0
        %796 = vmatprep.subr.bf16.mxu0 0
        %797 = vmatpush1.bf16.msra.mxu0 0
        %798 = vmatprep.subr.bf16.mxu0 0
        %799 = vmatpush1.bf16.msra.mxu0 0
        %800 = vmatprep.subr.bf16.mxu0 0
        %801 = vmatpush1.bf16.msra.mxu0 0
        %802 = vmatprep.subr.bf16.mxu0 0
        %803 = vmatpush1.bf16.msra.mxu0 0
        %804 = vmatprep.subr.bf16.mxu0 0
        %805 = vmatpush1.bf16.msra.mxu0 0
        %806 = vmatprep.subr.bf16.mxu0 0
        %807 = vmatpush1.bf16.msra.mxu0 0
        %808 = vmatprep.subr.bf16.mxu0 0
        %809 = vmatpush1.bf16.msra.mxu0 0
        %810 = vmatprep.subr.bf16.mxu0 0
        %811 = vmatpush1.bf16.msra.mxu0 0
        %812 = vmatprep.subr.bf16.mxu0 0
        %813 = vmatpush1.bf16.msra.mxu0 0
        %814 = vmatprep.subr.bf16.mxu0 0
        %815 = vmatpush1.bf16.msra.mxu0 0
        %816 = vmatprep.subr.bf16.mxu0 0
        %817 = vmatpush1.bf16.msra.mxu0 0
        %818 = vmatprep.subr.bf16.mxu0 0
        %819 = vmatpush1.bf16.msra.mxu0 0
        %820 = vmatprep.mubr.bf16.mxu0 0
        %821 = vmatmul.mubr.bf16.gmra.mrb[0].mxu0 %v777
        %v822 = vpop.f32.mrb[0].mxu0
        %v823 = vadd.f32 %v734, %v822
        %v824 = vpop.f32.mrb[0].mxu0
        %v825 = vadd.f32 %v734, %v824
        %v826 = vpop.f32.mrb[0].mxu0
        %v827 = vpop.f32.mrb[0].mxu0
        %828 = vdwg.mxu0
        %829 = vmatprep.subr.bf16.mxu0 0
        %830 = vmatpush1.bf16.msra.mxu0 %v750
        %831 = vmatprep.subr.bf16.mxu0 0
        %832 = vmatpush1.bf16.msra.mxu0 %v756
        %833 = vmatprep.subr.bf16.mxu0 0
        %834 = vmatpush1.bf16.msra.mxu0 %v786
        %835 = vmatprep.subr.bf16.mxu0 0
        %836 = vmatpush1.bf16.msra.mxu0 0
        %837 = vmatprep.subr.bf16.mxu0 0
        %838 = vmatpush1.bf16.msra.mxu0 0
        %839 = vmatprep.subr.bf16.mxu0 0
        %840 = vmatpush1.bf16.msra.mxu0 0
        %841 = vmatprep.subr.bf16.mxu0 0
        %842 = vmatpush1.bf16.msra.mxu0 0
        %843 = vmatprep.subr.bf16.mxu0 0
        %844 = vmatpush1.bf16.msra.mxu0 0
        %845 = vmatprep.subr.bf16.mxu0 0
        %846 = vmatpush1.bf16.msra.mxu0 0
        %847 = vmatprep.subr.bf16.mxu0 0
        %848 = vmatpush1.bf16.msra.mxu0 0
        %849 = vmatprep.subr.bf16.mxu0 0
        %850 = vmatpush1.bf16.msra.mxu0 0
        %851 = vmatprep.subr.bf16.mxu0 0
        %852 = vmatpush1.bf16.msra.mxu0 0
        %853 = vmatprep.subr.bf16.mxu0 0
        %854 = vmatpush1.bf16.msra.mxu0 0
        %855 = vmatprep.subr.bf16.mxu0 0
        %856 = vmatpush1.bf16.msra.mxu0 0
        %857 = vmatprep.subr.bf16.mxu0 0
        %858 = vmatpush1.bf16.msra.mxu0 0
        %859 = vmatprep.subr.bf16.mxu0 0
        %860 = vmatpush1.bf16.msra.mxu0 0
        %861 = vmatprep.mubr.bf16.mxu0 0
        %862 = vmatmul.mubr.bf16.gmra.mrb[0].mxu0 %v777
        %v863 = vpop.f32.mrb[0].mxu0
        %v864 = vadd.f32 %v734, %v863
        %v865 = vpop.f32.mrb[0].mxu0
        %v866 = vpop.f32.mrb[0].mxu0
        %v867 = vpop.f32.mrb[0].mxu0
        %868 = vdwg.mxu0
        %v869 = vmax.f32 %v823, 0.0
        %v870 = vmax.f32 %v825, 0.0
        %v871 = vmax.f32 %v864, 0.0
        %v872 = vmul.f32 %v869, %v577
        %v873 = vmul.f32 %v870, %v581
        %v874 = vmul.f32 %v871, %v585
        %v878 = vcombine.low %v872, %v873
        %879 = vrot.lane.b32.xlu0 %v878, 42
        %v880 = vpop.permute.xlu0 %879
        %881 = vrot.lane.b32.xlu0 %v874, 42
        %v882 = vpop.permute.xlu0 %881
        %v883 = vrot.slane %v880, 4
        %v884 = vsel %vm601, %v883, %v880
        %v885 = vsel %vm601, %v883, %v882
        %888 = vst.msk [vmem:[#allocation3] sm:$0xff] %vm608, %v884
        %889 = vst.msk [vmem:[#allocation3 + $0x8] sm:$0xf] %vm610, %v885
        %v890 = vld [vmem:[#allocation3] sm:$0xff]
        %v891 = vld [vmem:[#allocation3 + $0x8] sm:$0xf]
        %v892 = vld [vmem:[#allocation3 + $0x8] sm:$0xff]
        %v895 = vcombine.high %v890, %v890
        %v897 = vcombine.low %v890, %v890
        %v898 = vcombine.low %v891, %v891
        %899 = vrot.lane.b32.xlu0 %v897, 127
        %v900 = vpop.permute.xlu0 %899
        %901 = vrot.lane.b32.xlu0 %v890, 127
        %v902 = vpop.permute.xlu0 %901
        %903 = vrot.lane.b32.xlu0 %v898, 127
        %v904 = vpop.permute.xlu0 %903
        %v905 = vsel %vm334, %v900, %v902
        %v906 = vsel %vm334, %v902, %v904
        %910 = vrot.lane.b32.xlu0 %v890, 126
        %v911 = vpop.permute.xlu0 %910
        %912 = vrot.lane.b32.xlu0 %v895, 126
        %v913 = vpop.permute.xlu0 %912
        %914 = vrot.lane.b32.xlu0 %v891, 126
        %v915 = vpop.permute.xlu0 %914
        %v916 = vsel %vm346, %v911, %v913
        %v917 = vsel %vm346, %v913, %v915
        %921 = vrot.lane.b32.xlu0 %v897, 125
        %v922 = vpop.permute.xlu0 %921
        %923 = vrot.lane.b32.xlu0 %v890, 125
        %v924 = vpop.permute.xlu0 %923
        %925 = vrot.lane.b32.xlu0 %v898, 125
        %v926 = vpop.permute.xlu0 %925
        %vm927 = vcmask 1022976
        %v928 = vsel %vm927, %v922, %v924
        %v929 = vsel %vm927, %v924, %v926
        %933 = vrot.lane.b32.xlu0 %v890, 124
        %v934 = vpop.permute.xlu0 %933
        %935 = vrot.lane.b32.xlu0 %v895, 124
        %v936 = vpop.permute.xlu0 %935
        %937 = vrot.lane.b32.xlu0 %v891, 124
        %v938 = vpop.permute.xlu0 %937
        %vm939 = vcmask 1014784
        %v940 = vsel %vm939, %v934, %v936
        %v941 = vsel %vm939, %v936, %v938
        %945 = vrot.lane.b32.xlu0 %v897, 108
        %v946 = vpop.permute.xlu0 %945
        %947 = vrot.lane.b32.xlu0 %v890, 108
        %v948 = vpop.permute.xlu0 %947
        %949 = vrot.lane.b32.xlu0 %v898, 108
        %v950 = vpop.permute.xlu0 %949
        %v951 = vsel %vm358, %v946, %v948
        %v952 = vsel %vm358, %v948, %v950
        %956 = vrot.lane.b32.xlu0 %v890, 107
        %v957 = vpop.permute.xlu0 %956
        %958 = vrot.lane.b32.xlu0 %v895, 107
        %v959 = vpop.permute.xlu0 %958
        %960 = vrot.lane.b32.xlu0 %v891, 107
        %v961 = vpop.permute.xlu0 %960
        %v962 = vsel %vm370, %v957, %v959
        %v963 = vsel %vm370, %v959, %v961
        %967 = vrot.lane.b32.xlu0 %v897, 106
        %v968 = vpop.permute.xlu0 %967
        %969 = vrot.lane.b32.xlu0 %v890, 106
        %v970 = vpop.permute.xlu0 %969
        %971 = vrot.lane.b32.xlu0 %v898, 106
        %v972 = vpop.permute.xlu0 %971
        %v973 = vsel %vm382, %v968, %v970
        %v974 = vsel %vm382, %v970, %v972
        %978 = vrot.lane.b32.xlu0 %v890, 105
        %v979 = vpop.permute.xlu0 %978
        %980 = vrot.lane.b32.xlu0 %v895, 105
        %v981 = vpop.permute.xlu0 %980
        %982 = vrot.lane.b32.xlu0 %v891, 105
        %v983 = vpop.permute.xlu0 %982
        %vm984 = vcmask 859136
        %v985 = vsel %vm984, %v979, %v981
        %v986 = vsel %vm984, %v981, %v983
        %990 = vrot.lane.b32.xlu0 %v897, 104
        %v991 = vpop.permute.xlu0 %990
        %992 = vrot.lane.b32.xlu0 %v890, 104
        %v993 = vpop.permute.xlu0 %992
        %994 = vrot.lane.b32.xlu0 %v898, 104
        %v995 = vpop.permute.xlu0 %994
        %vm996 = vcmask 850944
        %v997 = vsel %vm996, %v991, %v993
        %v998 = vsel %vm996, %v993, %v995
        %1002 = vrot.lane.b32.xlu0 %v890, 88
        %v1003 = vpop.permute.xlu0 %1002
        %1004 = vrot.lane.b32.xlu0 %v895, 88
        %v1005 = vpop.permute.xlu0 %1004
        %1006 = vrot.lane.b32.xlu0 %v891, 88
        %v1007 = vpop.permute.xlu0 %1006
        %v1008 = vsel %vm394, %v1003, %v1005
        %v1009 = vsel %vm394, %v1005, %v1007
        %1013 = vrot.lane.b32.xlu0 %v897, 87
        %v1014 = vpop.permute.xlu0 %1013
        %1015 = vrot.lane.b32.xlu0 %v890, 87
        %v1016 = vpop.permute.xlu0 %1015
        %1017 = vrot.lane.b32.xlu0 %v898, 87
        %v1018 = vpop.permute.xlu0 %1017
        %v1019 = vsel %vm406, %v1014, %v1016
        %v1020 = vsel %vm406, %v1016, %v1018
        %1024 = vrot.lane.b32.xlu0 %v890, 86
        %v1025 = vpop.permute.xlu0 %1024
        %1026 = vrot.lane.b32.xlu0 %v895, 86
        %v1027 = vpop.permute.xlu0 %1026
        %1028 = vrot.lane.b32.xlu0 %v891, 86
        %v1029 = vpop.permute.xlu0 %1028
        %v1030 = vsel %vm418, %v1025, %v1027
        %v1031 = vsel %vm418, %v1027, %v1029
        %1035 = vrot.lane.b32.xlu0 %v897, 85
        %v1036 = vpop.permute.xlu0 %1035
        %1037 = vrot.lane.b32.xlu0 %v890, 85
        %v1038 = vpop.permute.xlu0 %1037
        %1039 = vrot.lane.b32.xlu0 %v898, 85
        %v1040 = vpop.permute.xlu0 %1039
        %vm1041 = vcmask 695296
        %v1042 = vsel %vm1041, %v1036, %v1038
        %v1043 = vsel %vm1041, %v1038, %v1040
        %1047 = vrot.lane.b32.xlu0 %v890, 84
        %v1048 = vpop.permute.xlu0 %1047
        %1049 = vrot.lane.b32.xlu0 %v895, 84
        %v1050 = vpop.permute.xlu0 %1049
        %1051 = vrot.lane.b32.xlu0 %v891, 84
        %v1052 = vpop.permute.xlu0 %1051
        %vm1053 = vcmask 687104
        %v1054 = vsel %vm1053, %v1048, %v1050
        %v1055 = vsel %vm1053, %v1050, %v1052
        %1059 = vrot.lane.b32.xlu0 %v897, 68
        %v1060 = vpop.permute.xlu0 %1059
        %1061 = vrot.lane.b32.xlu0 %v890, 68
        %v1062 = vpop.permute.xlu0 %1061
        %1063 = vrot.lane.b32.xlu0 %v898, 68
        %v1064 = vpop.permute.xlu0 %1063
        %vm1065 = vcmask 556032
        %v1066 = vsel %vm1065, %v1060, %v1062
        %v1067 = vsel %vm1065, %v1062, %v1064
        %v1071 = vsel %vm436, %v890, %v905
        %v1072 = vsel %vm436, %v895, %v906
        %v1073 = vsel %vm436, %v891, %v904
        %v1074 = vsel %vm436, %v916, %v928
        %v1075 = vsel %vm436, %v917, %v929
        %v1076 = vsel %vm436, %v915, %v926
        %v1077 = vsel %vm436, %v940, %v951
        %v1078 = vsel %vm436, %v941, %v952
        %v1079 = vsel %vm436, %v938, %v950
        %v1080 = vsel %vm436, %v962, %v973
        %v1081 = vsel %vm436, %v963, %v974
        %v1082 = vsel %vm436, %v961, %v972
        %v1083 = vsel %vm436, %v985, %v997
        %v1084 = vsel %vm436, %v986, %v998
        %v1085 = vsel %vm436, %v983, %v995
        %v1086 = vsel %vm436, %v1008, %v1019
        %v1087 = vsel %vm436, %v1009, %v1020
        %v1088 = vsel %vm436, %v1007, %v1018
        %v1089 = vsel %vm436, %v1030, %v1042
        %v1090 = vsel %vm436, %v1031, %v1043
        %v1091 = vsel %vm436, %v1029, %v1040
        %v1092 = vsel %vm436, %v1054, %v1066
        %v1093 = vsel %vm436, %v1055, %v1067
        %v1094 = vsel %vm436, %v1052, %v1064
        %v1096 = vcombine.high %v892, %v892
        %1097 = vrot.lane.b32.xlu0 %v890, 109
        %v1098 = vpop.permute.xlu0 %1097
        %1099 = vrot.lane.b32.xlu0 %v895, 109
        %v1100 = vpop.permute.xlu0 %1099
        %1101 = vrot.lane.b32.xlu0 %v892, 109
        %v1102 = vpop.permute.xlu0 %1101
        %1103 = vrot.lane.b32.xlu0 %v1096, 109
        %v1104 = vpop.permute.xlu0 %1103
        %vm1105 = vcmask 891904
        %v1106 = vsel %vm1105, %v1098, %v1100
        %v1107 = vsel %vm1105, %v1100, %v1102
        %v1108 = vsel %vm1105, %v1102, %v1104
        %v1112 = vcombine.low %v892, %v892
        %1113 = vrot.lane.b32.xlu0 %v1112, 108
        %v1114 = vpop.permute.xlu0 %1113
        %1115 = vrot.lane.b32.xlu0 %v892, 108
        %v1116 = vpop.permute.xlu0 %1115
        %v1117 = vsel %vm358, %v948, %v1114
        %v1118 = vsel %vm358, %v1114, %v1116
        %1121 = vrot.lane.b32.xlu0 %v892, 107
        %v1122 = vpop.permute.xlu0 %1121
        %1123 = vrot.lane.b32.xlu0 %v1096, 107
        %v1124 = vpop.permute.xlu0 %1123
        %v1125 = vsel %vm370, %v959, %v1122
        %v1126 = vsel %vm370, %v1122, %v1124
        %1129 = vrot.lane.b32.xlu0 %v1112, 106
        %v1130 = vpop.permute.xlu0 %1129
        %1131 = vrot.lane.b32.xlu0 %v892, 106
        %v1132 = vpop.permute.xlu0 %1131
        %v1133 = vsel %vm382, %v970, %v1130
        %v1134 = vsel %vm382, %v1130, %v1132
        %1137 = vrot.lane.b32.xlu0 %v892, 105
        %v1138 = vpop.permute.xlu0 %1137
        %1139 = vrot.lane.b32.xlu0 %v1096, 105
        %v1140 = vpop.permute.xlu0 %1139
        %v1141 = vsel %vm984, %v981, %v1138
        %v1142 = vsel %vm984, %v1138, %v1140
        %v1143 = vsel %vm436, %v1106, %v951
        %v1144 = vsel %vm436, %v1107, %v1117
        %v1145 = vsel %vm436, %v1108, %v1118
        %v1146 = vsel %vm436, %v1125, %v1133
        %v1147 = vsel %vm436, %v1126, %v1134
        %1160 = vrot.lane.b32.xlu0 %v1071, 67
        %v1161 = vpop.permute.xlu0 %1160
        %1162 = vrot.lane.b32.xlu0 %v1072, 67
        %v1163 = vpop.permute.xlu0 %1162
        %1164 = vrot.lane.b32.xlu0 %v1073, 67
        %v1165 = vpop.permute.xlu0 %1164
        %1166 = vrot.lane.b32.xlu0 %v1074, 67
        %v1167 = vpop.permute.xlu0 %1166
        %1168 = vrot.lane.b32.xlu0 %v1075, 67
        %v1169 = vpop.permute.xlu0 %1168
        %1170 = vrot.lane.b32.xlu0 %v1076, 67
        %v1171 = vpop.permute.xlu0 %1170
        %1172 = vrot.lane.b32.xlu0 %v1143, 67
        %v1173 = vpop.permute.xlu0 %1172
        %1174 = vrot.lane.b32.xlu0 %v1144, 67
        %v1175 = vpop.permute.xlu0 %1174
        %1176 = vrot.lane.b32.xlu0 %v1145, 67
        %v1177 = vpop.permute.xlu0 %1176
        %1178 = vrot.lane.b32.xlu0 %v1080, 67
        %v1179 = vpop.permute.xlu0 %1178
        %1180 = vrot.lane.b32.xlu0 %v1146, 67
        %v1181 = vpop.permute.xlu0 %1180
        %1182 = vrot.lane.b32.xlu0 %v1147, 67
        %v1183 = vpop.permute.xlu0 %1182
        %1184 = vrot.lane.b32.xlu0 %v985, 67
        %v1185 = vpop.permute.xlu0 %1184
        %1186 = vrot.lane.b32.xlu0 %v1141, 67
        %v1187 = vpop.permute.xlu0 %1186
        %1188 = vrot.lane.b32.xlu0 %v1142, 67
        %v1189 = vpop.permute.xlu0 %1188
        %vm1190 = vcmask 547840
        %v1191 = vsel %vm1190, %v1161, %v1163
        %v1192 = vsel %vm1190, %v1163, %v1165
        %v1193 = vsel %vm1190, %v1167, %v1169
        %v1194 = vsel %vm1190, %v1169, %v1171
        %v1195 = vsel %vm1190, %v1173, %v1175
        %v1196 = vsel %vm1190, %v1175, %v1177
        %v1197 = vsel %vm1190, %v1179, %v1181
        %v1198 = vsel %vm1190, %v1181, %v1183
        %v1199 = vsel %vm1190, %v1185, %v1187
        %v1200 = vsel %vm1190, %v1187, %v1189
        %v1216 = vld [vmem:[%s6] sm:$0x3]
        %v1217 = vpack.c.bf16 %v1074, %v1071
        %v1218 = vpack.c.bf16 %v1075, %v1072
        %v1219 = vpack.c.bf16 %v1076, %v1073
        %v1220 = vpack.c.bf16 %v1080, %v1077
        %v1221 = vpack.c.bf16 %v1081, %v1078
        %v1222 = vpack.c.bf16 %v1082, %v1079
        %v1223 = vpack.c.bf16 %v1086, %v1083
        %v1224 = vpack.c.bf16 %v1087, %v1084
        %v1225 = vpack.c.bf16 %v1088, %v1085
        %v1226 = vpack.c.bf16 %v1092, %v1089
        %v1227 = vpack.c.bf16 %v1093, %v1090
        %v1228 = vpack.c.bf16 %v1094, %v1091
        %v1229 = vpack.c.bf16 %v1193, %v1191
        %v1230 = vpack.c.bf16 %v1194, %v1192
        %v1231 = vpack.c.bf16 %v1171, %v1165
        %v1232 = vpack.c.bf16 %v1197, %v1195
        %v1233 = vpack.c.bf16 %v1198, %v1196
        %v1234 = vpack.c.bf16 %v1183, %v1177
        %v1235 = vpack.c.bf16 %v1199, %v1199
        %v1236 = vpack.c.bf16 %v1200, %v1200
        %v1237 = vpack.c.bf16 %v1189, %v1189
        %v1238 = vld [vmem:[%s7] sm:$0xf]
        %1240 = vset.pattern.permute.xlu0 0
        %1241 = vperm.xlu0 %1240, %v1238
        %v1242 = vpop.permute.xlu0 %1241
        %vm1244 = vcmask 818176
        %v1246 = vsel %vm1244, %v1216, 0
        %v1249 = vsel %vm428, %v1235, 0
        %v1252 = vsel %vm428, %v1236, 0
        %v1255 = vsel %vm428, %v1237, 0
        %1257 = vmatprep.subr.bf16.mxu0 %v1218
        %1258 = vmatpush1.bf16.msra.mxu0 %v1217
        %1259 = vmatprep.subr.bf16.mxu0 %v1221
        %1260 = vmatpush1.bf16.msra.mxu0 %v1220
        %1261 = vmatprep.subr.bf16.mxu0 %v1224
        %1262 = vmatpush1.bf16.msra.mxu0 %v1223
        %1263 = vmatprep.subr.bf16.mxu0 %v1227
        %1264 = vmatpush1.bf16.msra.mxu0 %v1226
        %1265 = vmatprep.subr.bf16.mxu0 %v1230
        %1266 = vmatpush1.bf16.msra.mxu0 %v1229
        %1267 = vmatprep.subr.bf16.mxu0 %v1233
        %1268 = vmatpush1.bf16.msra.mxu0 %v1232
        %1269 = vmatprep.subr.bf16.mxu0 %v1252
        %1270 = vmatpush1.bf16.msra.mxu0 %v1249
        %1271 = vmatprep.subr.bf16.mxu0 0
        %1272 = vmatpush1.bf16.msra.mxu0 0
        %1273 = vmatprep.subr.bf16.mxu0 0
        %1274 = vmatpush1.bf16.msra.mxu0 0
        %1275 = vmatprep.subr.bf16.mxu0 0
        %1276 = vmatpush1.bf16.msra.mxu0 0
        %1277 = vmatprep.subr.bf16.mxu0 0
        %1278 = vmatpush1.bf16.msra.mxu0 0
        %1279 = vmatprep.subr.bf16.mxu0 0
        %1280 = vmatpush1.bf16.msra.mxu0 0
        %1281 = vmatprep.subr.bf16.mxu0 0
        %1282 = vmatpush1.bf16.msra.mxu0 0
        %1283 = vmatprep.subr.bf16.mxu0 0
        %1284 = vmatpush1.bf16.msra.mxu0 0
        %1285 = vmatprep.subr.bf16.mxu0 0
        %1286 = vmatpush1.bf16.msra.mxu0 0
        %1287 = vmatprep.subr.bf16.mxu0 0
        %1288 = vmatpush1.bf16.msra.mxu0 0
        %1289 = vmatprep.mubr.bf16.mxu0 0
        %1290 = vmatmul.mubr.bf16.gmra.mrb[0].mxu0 %v1246
        %v1291 = vpop.f32.mrb[0].mxu0
        %v1292 = vadd.f32 %v1242, %v1291
        %v1293 = vpop.f32.mrb[0].mxu0
        %v1294 = vadd.f32 %v1242, %v1293
        %v1295 = vpop.f32.mrb[0].mxu0
        %v1296 = vpop.f32.mrb[0].mxu0
        %1297 = vdwg.mxu0
        %1298 = vmatprep.subr.bf16.mxu0 0
        %1299 = vmatpush1.bf16.msra.mxu0 %v1219
        %1300 = vmatprep.subr.bf16.mxu0 0
        %1301 = vmatpush1.bf16.msra.mxu0 %v1222
        %1302 = vmatprep.subr.bf16.mxu0 0
        %1303 = vmatpush1.bf16.msra.mxu0 %v1225
        %1304 = vmatprep.subr.bf16.mxu0 0
        %1305 = vmatpush1.bf16.msra.mxu0 %v1228
        %1306 = vmatprep.subr.bf16.mxu0 0
        %1307 = vmatpush1.bf16.msra.mxu0 %v1231
        %1308 = vmatprep.subr.bf16.mxu0 0
        %1309 = vmatpush1.bf16.msra.mxu0 %v1234
        %1310 = vmatprep.subr.bf16.mxu0 0
        %1311 = vmatpush1.bf16.msra.mxu0 %v1255
        %1312 = vmatprep.subr.bf16.mxu0 0
        %1313 = vmatpush1.bf16.msra.mxu0 0
        %1314 = vmatprep.subr.bf16.mxu0 0
        %1315 = vmatpush1.bf16.msra.mxu0 0
        %1316 = vmatprep.subr.bf16.mxu0 0
        %1317 = vmatpush1.bf16.msra.mxu0 0
        %1318 = vmatprep.subr.bf16.mxu0 0
        %1319 = vmatpush1.bf16.msra.mxu0 0
        %1320 = vmatprep.subr.bf16.mxu0 0
        %1321 = vmatpush1.bf16.msra.mxu0 0
        %1322 = vmatprep.subr.bf16.mxu0 0
        %1323 = vmatpush1.bf16.msra.mxu0 0
        %1324 = vmatprep.subr.bf16.mxu0 0
        %1325 = vmatpush1.bf16.msra.mxu0 0
        %1326 = vmatprep.subr.bf16.mxu0 0
        %1327 = vmatpush1.bf16.msra.mxu0 0
        %1328 = vmatprep.subr.bf16.mxu0 0
        %1329 = vmatpush1.bf16.msra.mxu0 0
        %1330 = vmatprep.mubr.bf16.mxu0 0
        %1331 = vmatmul.mubr.bf16.gmra.mrb[0].mxu0 %v1246
        %v1332 = vpop.f32.mrb[0].mxu0
        %v1333 = vadd.f32 %v1242, %v1332
        %v1334 = vpop.f32.mrb[0].mxu0
        %v1335 = vpop.f32.mrb[0].mxu0
        %v1336 = vpop.f32.mrb[0].mxu0
        %1337 = vdwg.mxu0
        %v1338 = vmul.f32 %v1292, %v577
        %v1339 = vmul.f32 %v1294, %v581
        %v1340 = vmul.f32 %v1333, %v585
        %1341 = vst.msk [vmem:[%s296] sm:$0xf] %vm303, 0.0
        %v1345 = vcombine.low %v1338, %v1339
        %1346 = vrot.lane.b32.xlu0 %v1345, 42
        %v1347 = vpop.permute.xlu0 %1346
        %1348 = vrot.lane.b32.xlu0 %v1340, 42
        %v1349 = vpop.permute.xlu0 %1348
        %v1350 = vrot.slane %v1347, 4
        %v1351 = vsel %vm601, %v1350, %v1347
        %v1352 = vsel %vm601, %v1350, %v1349
        %1355 = vst.msk [vmem:[%s296] sm:$0xff] %vm608, %v1351
        %1356 = vst.msk [vmem:[%s296 + $0x8] sm:$0xf] %vm610, %v1352
        %1357 = vst.msk [vmem:[%s296 + $0x8] sm:$0xff] %vm307, 0.0
        %s1358 = sand.u32 %s203, 1
        %s1359 = scalar_lea.sflag [#allocation5], %s1358
        %s1360 = sand.u32 %s203, 1
        %s1361 = smul.addr %s1360, 16
        %s1362 = scalar_lea.vmem [#allocation4], %s1361
        // Predicated region
        $region53: #{_run_chain.1} parent=51 // pred_check
          %p1363 = pneg %p213
        $region54: #{_run_chain.1} parent=51 // pred_check_branch
          %1365 = sbr.rel (%p1363) target = $region56
        $region55: #{_run_chain.1} parent=51 // pred_region
          %s1367 = ssub.s32 256, 256
          %1368 = vsyncadd %s1359, %s1367
          %s1369 = smul.addr %s22, 4
          %s1370 = smul.addr %s1369, 64
          %s1371 = scalar_lea.hbm %s8, %s1370
          %s1373 = sshll.u32 %s1362, 4
          %s1374 = int_to_ptr.vmem [resolvable:$true] %s1373
          %1376 = dma.vmem_to_hbm [thread:$0]  %s1374, 256, %s1371, %s1359
        $region56: #{_run_chain.1} parent=51 // pred_fallthru
          _
      $region52: #{_run_chain.1} parent=5 // pred_fallthru
        _
      %p1377 = scmp.le.s32.totalorder 2, %s17
      // Predicated region
      $region57: #{_run_chain.1} parent=5 // pred_check
        %p1378 = pneg %p1377
      $region58: #{_run_chain.1} parent=5 // pred_check_branch
        %1380 = sbr.rel (%p1378) target = $region60
      $region59: #{_run_chain.1} parent=5 // pred_region
        %s1381 = ssub.s32 %s17, 2
        // Predicated region
        $region61: #{_run_chain.1} parent=59 // pred_check
          %p1382 = pneg %p219
        $region62: #{_run_chain.1} parent=59 // pred_check_branch
          %1384 = sbr.rel (%p1382) target = $region64
        $region63: #{_run_chain.1} parent=59 // pred_region
          %s1385 = sand.u32 %s204, 1
          %s1386 = scalar_lea.sflag [#allocation5], %s1385
          %s1387 = sand.u32 %s204, 1
          %s1388 = smul.addr %s1387, 16
          %s1389 = scalar_lea.vmem [#allocation4], %s1388
          %1390 = dma.done %s1386, 256
        $region64: #{_run_chain.1} parent=59 // pred_fallthru
          _
      $region60: #{_run_chain.1} parent=5 // pred_fallthru
        _
    $region6: #{_run_chain.1} parent=1 // loop_footer
      %s21 = sadd.s32 1, %s17
    $region7: #{_run_chain.1} parent=1 // loop_footer_branch
      %16 = sbr.rel target = $region3
    $region8: #{_run_chain.1} parent=1 // loop_exit
      _
    %1391 = vsyncpa [#allocation5], 1
    %s1392 = scalar_lea.sflag [#allocation5], 1
    %1393 = vsyncpa %s1392, 1

</llo_original>
